<compile_context>
chip_gen: v6e
topology: v6e:2x2x1
jax: 0.10.0
libtpu: 0.0.40
codegen_flags: <defaults>
</compile_context>

<pallas_src>
import jax
import jax.numpy as jnp
import numpy as np
from jax import lax
from jax.experimental import pallas as pl
from jax.experimental.pallas import tpu as pltpu

BN_EPS = 1e-5
_LANE = 128


def _round_up(n, m):
    return ((n + m - 1) // m) * m


def _pad2(a, rows, cols):
    r, c = a.shape
    return jnp.pad(a, ((0, rows - r), (0, cols - c)))


# --------------------------------------------------------------------------
# Kernel helpers
# --------------------------------------------------------------------------
def _dot_bf16(a_f32, w_bf16):
    # bf16 operands on the MXU, f32 accumulation.
    return jnp.dot(a_f32.astype(jnp.bfloat16), w_bf16,
                   preferred_element_type=jnp.float32)


def _bn_affine(h, gamma, beta):
    """Training-mode BatchNorm1d, two-pass (centered) variance, folded affine."""
    inv_n = 1.0 / h.shape[0]
    mean = jnp.sum(h, axis=0, keepdims=True) * inv_n
    centered = h - mean
    var = jnp.sum(centered * centered, axis=0, keepdims=True) * inv_n
    scale = gamma * lax.rsqrt(var + BN_EPS)
    return centered * scale + beta


# --------------------------------------------------------------------------
# Kernel
# --------------------------------------------------------------------------
def cvae_kernel(
    # VMEM inputs (small)
    x_ref, cond_ref, eps_ref, hvec_ref, bh_ref, b4_ref,
    # HBM (ANY) weights, streamed manually
    w1_hbm, rw_hbm, wh_hbm, w3z_hbm, w3c_hbm, w4_hbm,
    # output: single lane-dense slab [recon_pad | mu_pad | logvar_pad]
    out_ref,
    # VMEM scratch weight buffers + DMA semaphores
    w1_v, rw_v, wh_v, w3z_v, w3c_v, w4_v, sem,
):
    Dp = x_ref.shape[1]
    Lp = eps_ref.shape[1]

    def start(src, dst, s):
        cp = pltpu.make_async_copy(src, dst, s)
        cp.start()
        return cp

    # Kick off weight DMAs in use order.  Only fc1's weight is on the critical
    # path; everything else streams in behind earlier matmuls.
    c_w1 = start(w1_hbm, w1_v, sem.at[0])
    c_r1a = start(rw_hbm.at[0], rw_v.at[0], sem.at[1])   # res1.fc1
    c_r1b = start(rw_hbm.at[1], rw_v.at[1], sem.at[2])   # res1.fc2
    c_wh = start(wh_hbm, wh_v, sem.at[3])
    c_w3z = start(w3z_hbm, w3z_v, sem.at[4])
    c_w3c = start(w3c_hbm, w3c_v, sem.at[5])
    c_w4 = start(w4_hbm, w4_v, sem.at[6])

    # Small per-feature params: one read each, kept as locals.
    (b1, r1g1, r1be1, r1g2, r1be2,
     b3, r2g1, r2be1, r2g2, r2be2) = [hvec_ref[i:i + 1, :] for i in range(10)]

    x = x_ref[...]
    cond = cond_ref[...]
    eps = eps_ref[...]

    # ----- encode: fc1 -----
    c_w1.wait()
    h = _dot_bf16(x, w1_v[...]) + b1

    # ----- res1 (pre-BN biases dropped: cancelled by training-mode BN) -----
    c_r1a.wait()
    t = _dot_bf16(h, rw_v[0])
    # slot 0 consumed -> prefetch res2.fc1's weight into it (overlaps res1 tail).
    c_r2a = start(rw_hbm.at[2], rw_v.at[0], sem.at[1])
    t = jnp.maximum(_bn_affine(t, r1g1, r1be1), 0.0)

    c_r1b.wait()
    t = _dot_bf16(t, rw_v[1])
    c_r2b = start(rw_hbm.at[3], rw_v.at[1], sem.at[2])
    t = _bn_affine(t, r1g2, r1be2)
    h = jnp.maximum(t + h, 0.0)

    # ----- fused mu | logvar head: one (Hp, 2*Lp) matmul -----
    c_wh.wait()
    ml = _dot_bf16(h, wh_v[...]) + bh_ref[...]
    mu = ml[:, :Lp]
    logvar = ml[:, Lp:]

    # ----- reparameterize -----
    z = mu + eps * jnp.exp(0.5 * logvar)

    # ----- decode: fc3 as two summed matmuls (no cat(z, cond) materialized) --
    c_w3z.wait()
    c_w3c.wait()
    h2 = _dot_bf16(z, w3z_v[...]) + _dot_bf16(cond, w3c_v[...]) + b3

    # ----- res2 -----
    c_r2a.wait()
    t = _dot_bf16(h2, rw_v[0])
    t = jnp.maximum(_bn_affine(t, r2g1, r2be1), 0.0)

    c_r2b.wait()
    t = _dot_bf16(t, rw_v[1])
    t = _bn_affine(t, r2g2, r2be2)
    h2 = jnp.maximum(t + h2, 0.0)

    # ----- output head -----
    c_w4.wait()
    recon = _dot_bf16(h2, w4_v[...]) + b4_ref[...]

    # lane-dense stores (Dp and Lp are multiples of 128).
    out_ref[:, :Dp] = recon
    out_ref[:, Dp:Dp + Lp] = mu
    out_ref[:, Dp + Lp:] = logvar


# --------------------------------------------------------------------------
# Parameters: PyTorch-default init, then pack/pad for the kernel
# --------------------------------------------------------------------------
def make_params(key, input_dim, hidden_dim, latent_dim, cond_dim):
    """Raw f32 params with PyTorch default init (U(+-1/sqrt(fan_in)))."""
    keys = iter(jax.random.split(key, 64))

    def lin(fan_in, fan_out):
        bound = 1.0 / np.sqrt(fan_in)
        w = jax.random.uniform(next(keys), (fan_in, fan_out), jnp.float32, -bound, bound)
        b = jax.random.uniform(next(keys), (1, fan_out), jnp.float32, -bound, bound)
        return w, b

    def bn(dim):
        return jnp.ones((1, dim), jnp.float32), jnp.zeros((1, dim), jnp.float32)

    def resblock(dim):
        w1, b1 = lin(dim, dim)
        g1, be1 = bn(dim)
        w2, b2 = lin(dim, dim)
        g2, be2 = bn(dim)
        return dict(w1=w1, b1=b1, g1=g1, be1=be1, w2=w2, b2=b2, g2=g2, be2=be2)

    p = {}
    p["w1"], p["b1"] = lin(input_dim, hidden_dim)
    p["res1"] = resblock(hidden_dim)
    p["w21"], p["b21"] = lin(hidden_dim, latent_dim)
    p["w22"], p["b22"] = lin(hidden_dim, latent_dim)
    p["w3"], p["b3"] = lin(latent_dim + cond_dim, hidden_dim)
    p["res2"] = resblock(hidden_dim)
    p["w4"], p["b4"] = lin(hidden_dim, input_dim)
    return p


def pack_params(p, input_dim, hidden_dim, latent_dim, cond_dim):
    """Pad feature dims to 128-multiples, fuse heads, pack small vectors, bf16 weights."""
    Dp = _round_up(input_dim, _LANE)
    Hp = _round_up(hidden_dim, _LANE)
    Lp = _round_up(latent_dim, _LANE)
    Cp = _round_up(cond_dim, _LANE)
    bf = jnp.bfloat16

    w1 = _pad2(p["w1"], Dp, Hp).astype(bf)

    rw = jnp.stack([
        _pad2(p["res1"]["w1"], Hp, Hp),
        _pad2(p["res1"]["w2"], Hp, Hp),
        _pad2(p["res2"]["w1"], Hp, Hp),
        _pad2(p["res2"]["w2"], Hp, Hp),
    ]).astype(bf)

    # fused mu|logvar head, each half padded to Lp lanes.
    wh = jnp.zeros((Hp, 2 * Lp), jnp.float32)
    wh = wh.at[:hidden_dim, :latent_dim].set(p["w21"])
    wh = wh.at[:hidden_dim, Lp:Lp + latent_dim].set(p["w22"])
    wh = wh.astype(bf)
    bh = jnp.zeros((1, 2 * Lp), jnp.float32)
    bh = bh.at[:, :latent_dim].set(p["b21"])
    bh = bh.at[:, Lp:Lp + latent_dim].set(p["b22"])

    # fc3 split into z-rows and cond-rows (kernel sums two matmuls).
    w3z = _pad2(p["w3"][:latent_dim], Lp, Hp).astype(bf)
    w3c = _pad2(p["w3"][latent_dim:], Cp, Hp).astype(bf)

    w4 = _pad2(p["w4"], Hp, Dp).astype(bf)
    b4 = _pad2(p["b4"], 1, Dp)

    # hidden-width (1, hidden) params packed into one (10, Hp) slab.
    # Pre-BN biases (res*.b1 / res*.b2) are intentionally omitted: training-mode
    # BatchNorm's mean subtraction cancels them exactly.
    hvec = jnp.concatenate([
        _pad2(v, 1, Hp) for v in (
            p["b1"],
            p["res1"]["g1"], p["res1"]["be1"],
            p["res1"]["g2"], p["res1"]["be2"],
            p["b3"],
            p["res2"]["g1"], p["res2"]["be1"],
            p["res2"]["g2"], p["res2"]["be2"],
        )
    ], axis=0)

    return dict(w1=w1, rw=rw, wh=wh, w3z=w3z, w3c=w3c, w4=w4,
                hvec=hvec, bh=bh, b4=b4)


# --------------------------------------------------------------------------
# Wrapper
# --------------------------------------------------------------------------
def _vmem_cap_bytes():
    """Generation-aware physical VMEM per TensorCore (v5e/v6e 128 MiB, v7x 64 MiB)."""
    try:
        info = pltpu.get_tpu_info()
        cap = getattr(info, "vmem_capacity_bytes", None)
        if cap:
            return int(cap)
    except Exception:
        pass
    return 64 << 20   # conservative fallback (v7x per-TC)


@jax.jit
def conditional_ghdvae_forward(x, cond, eps, packed):
    B, input_dim = x.shape
    latent_dim = eps.shape[1]

    Dp, Hp = packed["w1"].shape
    Lp = packed["wh"].shape[1] // 2
    Cp = packed["w3c"].shape[0]
    out_w = Dp + 2 * Lp

    # TODO(synk): fold this padding into the kernel (zero-init VMEM slab) to
    # save one extra HBM pass over the activations at large batch.
    x_p = _pad2(x, B, Dp)
    cond_p = _pad2(cond, B, Cp)
    eps_p = _pad2(eps, B, Lp)

    inputs = (x_p, cond_p, eps_p, packed["hvec"], packed["bh"], packed["b4"],
              packed["w1"], packed["rw"], packed["wh"], packed["w3z"],
              packed["w3c"], packed["w4"])

    vmem_spec = pl.BlockSpec(memory_space=pltpu.MemorySpace.VMEM)
    any_spec = pl.BlockSpec(memory_space=pl.ANY)

    # VMEM footprint: weight scratch (bf16) + small VMEM inputs/outputs (f32)
    # + activation headroom; clamp to the generation's physical capacity.
    scratch_w_bytes = 2 * (Dp * Hp + 2 * Hp * Hp + Hp * 2 * Lp
                           + Lp * Hp + Cp * Hp + Hp * Dp)
    io_bytes = 4 * (B * (Dp + Cp + Lp + out_w) + 10 * Hp + 2 * Lp + Dp)
    act_bytes = 4 * 8 * B * max(Hp, Dp, 2 * Lp)
    need = scratch_w_bytes + io_bytes + act_bytes + (4 << 20)
    cap = (_vmem_cap_bytes() * 7) // 8
    vmem_limit = int(min(max(need, 16 << 20), cap))

    flops = 2 * B * (2 * Dp * Hp + 4 * Hp * Hp + 2 * Lp * Hp + (Lp + Cp) * Hp)
    cost = pl.CostEstimate(flops=int(flops),
                           transcendentals=int(B * Lp + 4 * B * Hp),
                           bytes_accessed=int(scratch_w_bytes + io_bytes))

    out = pl.pallas_call(
        cvae_kernel,
        out_shape=jax.ShapeDtypeStruct((B, out_w), jnp.float32),
        in_specs=[vmem_spec] * 6 + [any_spec] * 6,
        out_specs=vmem_spec,
        scratch_shapes=[
            pltpu.VMEM((Dp, Hp), jnp.bfloat16),          # w1
            pltpu.VMEM((2, Hp, Hp), jnp.bfloat16),       # resblock weight ping-pong
            pltpu.VMEM((Hp, 2 * Lp), jnp.bfloat16),      # fused mu|logvar head
            pltpu.VMEM((Lp, Hp), jnp.bfloat16),          # fc3 z-rows
            pltpu.VMEM((Cp, Hp), jnp.bfloat16),          # fc3 cond-rows
            pltpu.VMEM((Hp, Dp), jnp.bfloat16),          # w4
            pltpu.SemaphoreType.DMA((7,)),
        ],
        compiler_params=pltpu.CompilerParams(vmem_limit_bytes=vmem_limit),
        cost_estimate=cost,
    )(*inputs)

    recon = out[:, :input_dim]
    mu = out[:, Dp:Dp + latent_dim]
    logvar = out[:, Dp + Lp:Dp + Lp + latent_dim]
    return recon, mu, logvar


# --------------------------------------------------------------------------
# Pure-JAX references (for correctness checks)
# --------------------------------------------------------------------------
def ref_forward(x, cond, eps, p, *, mirror_kernel):
    """mirror_kernel=True replays the kernel's numerics (bf16 at the MXU,
    two-pass folded BN, dropped pre-BN biases, split fc3); False is the
    straight-f32 PyTorch-semantics path (mathematically equivalent)."""

    def dot(a, w):
        if mirror_kernel:
            return jnp.dot(a.astype(jnp.bfloat16), w.astype(jnp.bfloat16),
                           preferred_element_type=jnp.float32)
        return jnp.dot(a, w)

    def bn(h, g, be):
        m = jnp.mean(h, axis=0, keepdims=True)
        c = h - m
        v = jnp.mean(c * c, axis=0, keepdims=True)
        if mirror_kernel:
            return c * (g * lax.rsqrt(v + BN_EPS)) + be
        return c * lax.rsqrt(v + BN_EPS) * g + be

    def res(h, r):
        if mirror_kernel:
            o = jnp.maximum(bn(dot(h, r["w1"]), r["g1"], r["be1"]), 0.0)
            o = bn(dot(o, r["w2"]), r["g2"], r["be2"])
        else:
            o = jnp.maximum(bn(dot(h, r["w1"]) + r["b1"], r["g1"], r["be1"]), 0.0)
            o = bn(dot(o, r["w2"]) + r["b2"], r["g2"], r["be2"])
        return jnp.maximum(o + h, 0.0)

    h = dot(x, p["w1"]) + p["b1"]
    h = res(h, p["res1"])
    mu = dot(h, p["w21"]) + p["b21"]
    logvar = dot(h, p["w22"]) + p["b22"]
    z = mu + eps * jnp.exp(0.5 * logvar)
    L = z.shape[1]
    if mirror_kernel:
        h2 = dot(z, p["w3"][:L]) + dot(cond, p["w3"][L:]) + p["b3"]
    else:
        zc = jnp.concatenate([z, cond], axis=1)
        h2 = dot(zc, p["w3"]) + p["b3"]
    h2 = res(h2, p["res2"])
    recon = dot(h2, p["w4"]) + p["b4"]
    return recon, mu, logvar


if __name__ == "__main__":
    B, input_dim, hidden_dim, latent_dim, cond_dim = 8, 16, 32, 8, 2

    key = jax.random.PRNGKey(0)
    kx, kc, ke, kp = jax.random.split(key, 4)
    x = jax.random.normal(kx, (B, input_dim), jnp.float32)
    cond = jax.random.normal(kc, (B, cond_dim), jnp.float32)
    eps = jax.random.normal(ke, (B, latent_dim), jnp.float32)   # torch.randn_like(std)

    params = make_params(kp, input_dim, hidden_dim, latent_dim, cond_dim)
    packed = pack_params(params, input_dim, hidden_dim, latent_dim, cond_dim)

    recon, mu, logvar = conditional_ghdvae_forward(x, cond, eps, packed)
    jax.block_until_ready((recon, mu, logvar))

    # Tight check vs. a reference replaying the kernel's numerics.
    r_m, m_m, lv_m = ref_forward(x, cond, eps, params, mirror_kernel=True)
    np.testing.assert_allclose(np.asarray(recon), np.asarray(r_m), rtol=2e-3, atol=2e-3)
    np.testing.assert_allclose(np.asarray(mu), np.asarray(m_m), rtol=2e-3, atol=2e-3)
    np.testing.assert_allclose(np.asarray(logvar), np.asarray(lv_m), rtol=2e-3, atol=2e-3)

    # Loose sanity check vs. the straight-f32 PyTorch-semantics path
    # (bounds the bf16-weight drift; pre-BN bias drop is mathematically exact).
    r_f, m_f, lv_f = ref_forward(x, cond, eps, params, mirror_kernel=False)
    np.testing.assert_allclose(np.asarray(recon), np.asarray(r_f), rtol=1e-1, atol=1e-1)
    np.testing.assert_allclose(np.asarray(mu), np.asarray(m_f), rtol=1e-1, atol=1e-1)
    np.testing.assert_allclose(np.asarray(logvar), np.asarray(lv_f), rtol=1e-1, atol=1e-1)

    print("KERNEL_OK")
</pallas_src>

<mosaic_0001>
module attributes {stable_mosaic.version = 11 : i64} {
  func.func @cvae_kernel(%arg0: memref<8x128xf32, #tpu.memory_space<vmem>>, %arg1: memref<8x128xf32, #tpu.memory_space<vmem>>, %arg2: memref<8x128xf32, #tpu.memory_space<vmem>>, %arg3: memref<10x128xf32, #tpu.memory_space<vmem>>, %arg4: memref<1x256xf32, #tpu.memory_space<vmem>>, %arg5: memref<1x128xf32, #tpu.memory_space<vmem>>, %arg6: memref<128x128xbf16, #tpu.memory_space<any>>, %arg7: memref<4x128x128xbf16, #tpu.memory_space<any>>, %arg8: memref<128x256xbf16, #tpu.memory_space<any>>, %arg9: memref<128x128xbf16, #tpu.memory_space<any>>, %arg10: memref<128x128xbf16, #tpu.memory_space<any>>, %arg11: memref<128x128xbf16, #tpu.memory_space<any>>, %arg12: memref<8x384xf32, #tpu.memory_space<vmem>>, %arg13: memref<128x128xbf16, #tpu.memory_space<vmem>>, %arg14: memref<2x128x128xbf16, #tpu.memory_space<vmem>>, %arg15: memref<128x256xbf16, #tpu.memory_space<vmem>>, %arg16: memref<128x128xbf16, #tpu.memory_space<vmem>>, %arg17: memref<128x128xbf16, #tpu.memory_space<vmem>>, %arg18: memref<128x128xbf16, #tpu.memory_space<vmem>>, %arg19: memref<7x!tpu.dma_semaphore, #tpu.memory_space<semaphore_mem>>) attributes {dimension_semantics = [], scalar_prefetch = 0 : i64, scratch_operands = 7 : i64, tpu.core_type = #tpu.core_type<tc>} {
    %c0_i32 = arith.constant 0 : i32
    %0 = tpu.memref_slice %arg19[%c0_i32] : memref<7x!tpu.dma_semaphore, #tpu.memory_space<semaphore_mem>> -> memref<1x!tpu.dma_semaphore, #tpu.memory_space<semaphore_mem>>
    %1 = tpu.memref_squeeze %0 : memref<1x!tpu.dma_semaphore, #tpu.memory_space<semaphore_mem>> -> memref<!tpu.dma_semaphore, #tpu.memory_space<semaphore_mem>>
    tpu.enqueue_dma source(%arg6 : memref<128x128xbf16, #tpu.memory_space<any>>) target(%arg13 : memref<128x128xbf16, #tpu.memory_space<vmem>>) target_semaphore(%1 : memref<!tpu.dma_semaphore, #tpu.memory_space<semaphore_mem>>)
    %c0_i32_0 = arith.constant 0 : i32
    %c0_i32_1 = arith.constant 0 : i32
    %c1_i32 = arith.constant 1 : i32
    %c0_i32_2 = arith.constant 0 : i32
    %c0_i32_3 = arith.constant 0 : i32
    %2 = tpu.memref_slice %arg7[%c0_i32_0, %c0_i32_2, %c0_i32_3] : memref<4x128x128xbf16, #tpu.memory_space<any>> -> memref<1x128x128xbf16, #tpu.memory_space<any>>
    %3 = tpu.memref_squeeze %2 : memref<1x128x128xbf16, #tpu.memory_space<any>> -> memref<128x128xbf16, #tpu.memory_space<any>>
    %c0_i32_4 = arith.constant 0 : i32
    %c0_i32_5 = arith.constant 0 : i32
    %4 = tpu.memref_slice %arg14[%c0_i32_1, %c0_i32_4, %c0_i32_5] : memref<2x128x128xbf16, #tpu.memory_space<vmem>> -> memref<1x128x128xbf16, #tpu.memory_space<vmem>>
    %5 = tpu.memref_squeeze %4 : memref<1x128x128xbf16, #tpu.memory_space<vmem>> -> memref<128x128xbf16, #tpu.memory_space<vmem>>
    %6 = tpu.memref_slice %arg19[%c1_i32] : memref<7x!tpu.dma_semaphore, #tpu.memory_space<semaphore_mem>> -> memref<1x!tpu.dma_semaphore, #tpu.memory_space<semaphore_mem>>
    %7 = tpu.memref_squeeze %6 : memref<1x!tpu.dma_semaphore, #tpu.memory_space<semaphore_mem>> -> memref<!tpu.dma_semaphore, #tpu.memory_space<semaphore_mem>>
    tpu.enqueue_dma source(%3 : memref<128x128xbf16, #tpu.memory_space<any>>) target(%5 : memref<128x128xbf16, #tpu.memory_space<vmem>>) target_semaphore(%7 : memref<!tpu.dma_semaphore, #tpu.memory_space<semaphore_mem>>)
    %c1_i32_6 = arith.constant 1 : i32
    %c1_i32_7 = arith.constant 1 : i32
    %c2_i32 = arith.constant 2 : i32
    %c0_i32_8 = arith.constant 0 : i32
    %c0_i32_9 = arith.constant 0 : i32
    %8 = tpu.memref_slice %arg7[%c1_i32_6, %c0_i32_8, %c0_i32_9] : memref<4x128x128xbf16, #tpu.memory_space<any>> -> memref<1x128x128xbf16, #tpu.memory_space<any>>
    %9 = tpu.memref_squeeze %8 : memref<1x128x128xbf16, #tpu.memory_space<any>> -> memref<128x128xbf16, #tpu.memory_space<any>>
    %c0_i32_10 = arith.constant 0 : i32
    %c0_i32_11 = arith.constant 0 : i32
    %10 = tpu.memref_slice %arg14[%c1_i32_7, %c0_i32_10, %c0_i32_11] : memref<2x128x128xbf16, #tpu.memory_space<vmem>> -> memref<1x128x128xbf16, #tpu.memory_space<vmem>>
    %11 = tpu.memref_squeeze %10 : memref<1x128x128xbf16, #tpu.memory_space<vmem>> -> memref<128x128xbf16, #tpu.memory_space<vmem>>
    %12 = tpu.memref_slice %arg19[%c2_i32] : memref<7x!tpu.dma_semaphore, #tpu.memory_space<semaphore_mem>> -> memref<1x!tpu.dma_semaphore, #tpu.memory_space<semaphore_mem>>
    %13 = tpu.memref_squeeze %12 : memref<1x!tpu.dma_semaphore, #tpu.memory_space<semaphore_mem>> -> memref<!tpu.dma_semaphore, #tpu.memory_space<semaphore_mem>>
    tpu.enqueue_dma source(%9 : memref<128x128xbf16, #tpu.memory_space<any>>) target(%11 : memref<128x128xbf16, #tpu.memory_space<vmem>>) target_semaphore(%13 : memref<!tpu.dma_semaphore, #tpu.memory_space<semaphore_mem>>)
    %c3_i32 = arith.constant 3 : i32
    %14 = tpu.memref_slice %arg19[%c3_i32] : memref<7x!tpu.dma_semaphore, #tpu.memory_space<semaphore_mem>> -> memref<1x!tpu.dma_semaphore, #tpu.memory_space<semaphore_mem>>
    %15 = tpu.memref_squeeze %14 : memref<1x!tpu.dma_semaphore, #tpu.memory_space<semaphore_mem>> -> memref<!tpu.dma_semaphore, #tpu.memory_space<semaphore_mem>>
    tpu.enqueue_dma source(%arg8 : memref<128x256xbf16, #tpu.memory_space<any>>) target(%arg15 : memref<128x256xbf16, #tpu.memory_space<vmem>>) target_semaphore(%15 : memref<!tpu.dma_semaphore, #tpu.memory_space<semaphore_mem>>)
    %c4_i32 = arith.constant 4 : i32
    %16 = tpu.memref_slice %arg19[%c4_i32] : memref<7x!tpu.dma_semaphore, #tpu.memory_space<semaphore_mem>> -> memref<1x!tpu.dma_semaphore, #tpu.memory_space<semaphore_mem>>
    %17 = tpu.memref_squeeze %16 : memref<1x!tpu.dma_semaphore, #tpu.memory_space<semaphore_mem>> -> memref<!tpu.dma_semaphore, #tpu.memory_space<semaphore_mem>>
    tpu.enqueue_dma source(%arg9 : memref<128x128xbf16, #tpu.memory_space<any>>) target(%arg16 : memref<128x128xbf16, #tpu.memory_space<vmem>>) target_semaphore(%17 : memref<!tpu.dma_semaphore, #tpu.memory_space<semaphore_mem>>)
    %c5_i32 = arith.constant 5 : i32
    %18 = tpu.memref_slice %arg19[%c5_i32] : memref<7x!tpu.dma_semaphore, #tpu.memory_space<semaphore_mem>> -> memref<1x!tpu.dma_semaphore, #tpu.memory_space<semaphore_mem>>
    %19 = tpu.memref_squeeze %18 : memref<1x!tpu.dma_semaphore, #tpu.memory_space<semaphore_mem>> -> memref<!tpu.dma_semaphore, #tpu.memory_space<semaphore_mem>>
    tpu.enqueue_dma source(%arg10 : memref<128x128xbf16, #tpu.memory_space<any>>) target(%arg17 : memref<128x128xbf16, #tpu.memory_space<vmem>>) target_semaphore(%19 : memref<!tpu.dma_semaphore, #tpu.memory_space<semaphore_mem>>)
    %c6_i32 = arith.constant 6 : i32
    %20 = tpu.memref_slice %arg19[%c6_i32] : memref<7x!tpu.dma_semaphore, #tpu.memory_space<semaphore_mem>> -> memref<1x!tpu.dma_semaphore, #tpu.memory_space<semaphore_mem>>
    %21 = tpu.memref_squeeze %20 : memref<1x!tpu.dma_semaphore, #tpu.memory_space<semaphore_mem>> -> memref<!tpu.dma_semaphore, #tpu.memory_space<semaphore_mem>>
    tpu.enqueue_dma source(%arg11 : memref<128x128xbf16, #tpu.memory_space<any>>) target(%arg18 : memref<128x128xbf16, #tpu.memory_space<vmem>>) target_semaphore(%21 : memref<!tpu.dma_semaphore, #tpu.memory_space<semaphore_mem>>)
    %c0 = arith.constant 0 : index
    %c0_12 = arith.constant 0 : index
    %22 = vector.load %arg3[%c0, %c0_12] : memref<10x128xf32, #tpu.memory_space<vmem>>, vector<1x128xf32>
    %c1 = arith.constant 1 : index
    %c0_13 = arith.constant 0 : index
    %23 = vector.load %arg3[%c1, %c0_13] : memref<10x128xf32, #tpu.memory_space<vmem>>, vector<1x128xf32>
    %c2 = arith.constant 2 : index
    %c0_14 = arith.constant 0 : index
    %24 = vector.load %arg3[%c2, %c0_14] : memref<10x128xf32, #tpu.memory_space<vmem>>, vector<1x128xf32>
    %c3 = arith.constant 3 : index
    %c0_15 = arith.constant 0 : index
    %25 = vector.load %arg3[%c3, %c0_15] : memref<10x128xf32, #tpu.memory_space<vmem>>, vector<1x128xf32>
    %c4 = arith.constant 4 : index
    %c0_16 = arith.constant 0 : index
    %26 = vector.load %arg3[%c4, %c0_16] : memref<10x128xf32, #tpu.memory_space<vmem>>, vector<1x128xf32>
    %c5 = arith.constant 5 : index
    %c0_17 = arith.constant 0 : index
    %27 = vector.load %arg3[%c5, %c0_17] : memref<10x128xf32, #tpu.memory_space<vmem>>, vector<1x128xf32>
    %c6 = arith.constant 6 : index
    %c0_18 = arith.constant 0 : index
    %28 = vector.load %arg3[%c6, %c0_18] : memref<10x128xf32, #tpu.memory_space<vmem>>, vector<1x128xf32>
    %c7 = arith.constant 7 : index
    %c0_19 = arith.constant 0 : index
    %29 = vector.load %arg3[%c7, %c0_19] : memref<10x128xf32, #tpu.memory_space<vmem>>, vector<1x128xf32>
    %c8 = arith.constant 8 : index
    %c0_20 = arith.constant 0 : index
    %30 = vector.load %arg3[%c8, %c0_20] : memref<10x128xf32, #tpu.memory_space<vmem>>, vector<1x128xf32>
    %c9 = arith.constant 9 : index
    %c0_21 = arith.constant 0 : index
    %31 = vector.load %arg3[%c9, %c0_21] : memref<10x128xf32, #tpu.memory_space<vmem>>, vector<1x128xf32>
    %c0_22 = arith.constant 0 : index
    %c0_23 = arith.constant 0 : index
    %32 = vector.load %arg0[%c0_22, %c0_23] : memref<8x128xf32, #tpu.memory_space<vmem>>, vector<8x128xf32>
    %c0_24 = arith.constant 0 : index
    %c0_25 = arith.constant 0 : index
    %33 = vector.load %arg1[%c0_24, %c0_25] : memref<8x128xf32, #tpu.memory_space<vmem>>, vector<8x128xf32>
    %c0_26 = arith.constant 0 : index
    %c0_27 = arith.constant 0 : index
    %34 = vector.load %arg2[%c0_26, %c0_27] : memref<8x128xf32, #tpu.memory_space<vmem>>, vector<8x128xf32>
    %c0_i32_28 = arith.constant 0 : i32
    %35 = tpu.memref_slice %arg19[%c0_i32_28] : memref<7x!tpu.dma_semaphore, #tpu.memory_space<semaphore_mem>> -> memref<1x!tpu.dma_semaphore, #tpu.memory_space<semaphore_mem>>
    %36 = tpu.memref_squeeze %35 : memref<1x!tpu.dma_semaphore, #tpu.memory_space<semaphore_mem>> -> memref<!tpu.dma_semaphore, #tpu.memory_space<semaphore_mem>>
    tpu.wait_dma2 semaphore(%36 : memref<!tpu.dma_semaphore, #tpu.memory_space<semaphore_mem>>) src(%arg6 : memref<128x128xbf16, #tpu.memory_space<any>>) dst(%arg13 : memref<128x128xbf16, #tpu.memory_space<vmem>>)
    %c0_29 = arith.constant 0 : index
    %c0_30 = arith.constant 0 : index
    %37 = vector.load %arg13[%c0_29, %c0_30] : memref<128x128xbf16, #tpu.memory_space<vmem>>, vector<128x128xbf16>
    %38 = arith.truncf %32 : vector<8x128xf32> to vector<8x128xbf16>
    %cst = arith.constant dense<0.000000e+00> : vector<8x128xf32>
    %39 = tpu.matmul %38, %37, %cst {dimension_numbers = #tpu.dot_dimension_numbers<[1], [0], [0], [1], [0, 0, 1, 1], [], []>} : vector<8x128xbf16>, vector<128x128xbf16>, vector<8x128xf32> -> vector<8x128xf32>
    %40 = vector.broadcast %22 : vector<1x128xf32> to vector<8x128xf32>
    %41 = arith.addf %39, %40 : vector<8x128xf32>
    %c0_i32_31 = arith.constant 0 : i32
    %c0_i32_32 = arith.constant 0 : i32
    %c1_i32_33 = arith.constant 1 : i32
    %c0_i32_34 = arith.constant 0 : i32
    %c0_i32_35 = arith.constant 0 : i32
    %42 = tpu.memref_slice %arg7[%c0_i32_31, %c0_i32_34, %c0_i32_35] : memref<4x128x128xbf16, #tpu.memory_space<any>> -> memref<1x128x128xbf16, #tpu.memory_space<any>>
    %43 = tpu.memref_squeeze %42 : memref<1x128x128xbf16, #tpu.memory_space<any>> -> memref<128x128xbf16, #tpu.memory_space<any>>
    %c0_i32_36 = arith.constant 0 : i32
    %c0_i32_37 = arith.constant 0 : i32
    %44 = tpu.memref_slice %arg14[%c0_i32_32, %c0_i32_36, %c0_i32_37] : memref<2x128x128xbf16, #tpu.memory_space<vmem>> -> memref<1x128x128xbf16, #tpu.memory_space<vmem>>
    %45 = tpu.memref_squeeze %44 : memref<1x128x128xbf16, #tpu.memory_space<vmem>> -> memref<128x128xbf16, #tpu.memory_space<vmem>>
    %46 = tpu.memref_slice %arg19[%c1_i32_33] : memref<7x!tpu.dma_semaphore, #tpu.memory_space<semaphore_mem>> -> memref<1x!tpu.dma_semaphore, #tpu.memory_space<semaphore_mem>>
    %47 = tpu.memref_squeeze %46 : memref<1x!tpu.dma_semaphore, #tpu.memory_space<semaphore_mem>> -> memref<!tpu.dma_semaphore, #tpu.memory_space<semaphore_mem>>
    tpu.wait_dma2 semaphore(%47 : memref<!tpu.dma_semaphore, #tpu.memory_space<semaphore_mem>>) src(%43 : memref<128x128xbf16, #tpu.memory_space<any>>) dst(%45 : memref<128x128xbf16, #tpu.memory_space<vmem>>)
    %c0_38 = arith.constant 0 : index
    %c0_39 = arith.constant 0 : index
    %c0_40 = arith.constant 0 : index
    %48 = vector.load %arg14[%c0_38, %c0_39, %c0_40] : memref<2x128x128xbf16, #tpu.memory_space<vmem>>, vector<1x128x128xbf16>
    %49 = vector.shape_cast %48 : vector<1x128x128xbf16> to vector<128x128xbf16>
    %50 = arith.truncf %41 : vector<8x128xf32> to vector<8x128xbf16>
    %cst_41 = arith.constant dense<0.000000e+00> : vector<8x128xf32>
    %51 = tpu.matmul %50, %49, %cst_41 {dimension_numbers = #tpu.dot_dimension_numbers<[1], [0], [0], [1], [0, 0, 1, 1], [], []>} : vector<8x128xbf16>, vector<128x128xbf16>, vector<8x128xf32> -> vector<8x128xf32>
    %c2_i32_42 = arith.constant 2 : i32
    %c0_i32_43 = arith.constant 0 : i32
    %c1_i32_44 = arith.constant 1 : i32
    %c0_i32_45 = arith.constant 0 : i32
    %c0_i32_46 = arith.constant 0 : i32
    %52 = tpu.memref_slice %arg7[%c2_i32_42, %c0_i32_45, %c0_i32_46] : memref<4x128x128xbf16, #tpu.memory_space<any>> -> memref<1x128x128xbf16, #tpu.memory_space<any>>
    %53 = tpu.memref_squeeze %52 : memref<1x128x128xbf16, #tpu.memory_space<any>> -> memref<128x128xbf16, #tpu.memory_space<any>>
    %c0_i32_47 = arith.constant 0 : i32
    %c0_i32_48 = arith.constant 0 : i32
    %54 = tpu.memref_slice %arg14[%c0_i32_43, %c0_i32_47, %c0_i32_48] : memref<2x128x128xbf16, #tpu.memory_space<vmem>> -> memref<1x128x128xbf16, #tpu.memory_space<vmem>>
    %55 = tpu.memref_squeeze %54 : memref<1x128x128xbf16, #tpu.memory_space<vmem>> -> memref<128x128xbf16, #tpu.memory_space<vmem>>
    %56 = tpu.memref_slice %arg19[%c1_i32_44] : memref<7x!tpu.dma_semaphore, #tpu.memory_space<semaphore_mem>> -> memref<1x!tpu.dma_semaphore, #tpu.memory_space<semaphore_mem>>
    %57 = tpu.memref_squeeze %56 : memref<1x!tpu.dma_semaphore, #tpu.memory_space<semaphore_mem>> -> memref<!tpu.dma_semaphore, #tpu.memory_space<semaphore_mem>>
    tpu.enqueue_dma source(%53 : memref<128x128xbf16, #tpu.memory_space<any>>) target(%55 : memref<128x128xbf16, #tpu.memory_space<vmem>>) target_semaphore(%57 : memref<!tpu.dma_semaphore, #tpu.memory_space<semaphore_mem>>)
    %cst_49 = arith.constant dense<0.000000e+00> : vector<128xf32>
    %58 = vector.multi_reduction <add>, %51, %cst_49 [0] : vector<8x128xf32> to vector<128xf32>
    %59 = vector.shape_cast %58 : vector<128xf32> to vector<1x128xf32>
    %cst_50 = arith.constant 1.250000e-01 : f32
    %60 = vector.broadcast %cst_50 : f32 to vector<1x128xf32>
    %61 = arith.mulf %59, %60 : vector<1x128xf32>
    %62 = vector.broadcast %61 : vector<1x128xf32> to vector<8x128xf32>
    %63 = arith.subf %51, %62 : vector<8x128xf32>
    %64 = arith.mulf %63, %63 : vector<8x128xf32>
    %cst_51 = arith.constant dense<0.000000e+00> : vector<128xf32>
    %65 = vector.multi_reduction <add>, %64, %cst_51 [0] : vector<8x128xf32> to vector<128xf32>
    %66 = vector.shape_cast %65 : vector<128xf32> to vector<1x128xf32>
    %cst_52 = arith.constant 1.250000e-01 : f32
    %67 = vector.broadcast %cst_52 : f32 to vector<1x128xf32>
    %68 = arith.mulf %66, %67 : vector<1x128xf32>
    %cst_53 = arith.constant 9.99999974E-6 : f32
    %69 = vector.broadcast %cst_53 : f32 to vector<1x128xf32>
    %70 = arith.addf %68, %69 : vector<1x128xf32>
    %71 = math.rsqrt %70 : vector<1x128xf32>
    %72 = arith.mulf %23, %71 : vector<1x128xf32>
    %73 = vector.broadcast %72 : vector<1x128xf32> to vector<8x128xf32>
    %74 = arith.mulf %63, %73 : vector<8x128xf32>
    %75 = vector.broadcast %24 : vector<1x128xf32> to vector<8x128xf32>
    %76 = arith.addf %74, %75 : vector<8x128xf32>
    %cst_54 = arith.constant 0.000000e+00 : f32
    %77 = vector.broadcast %cst_54 : f32 to vector<8x128xf32>
    %78 = arith.maximumf %76, %77 : vector<8x128xf32>
    %c1_i32_55 = arith.constant 1 : i32
    %c1_i32_56 = arith.constant 1 : i32
    %c2_i32_57 = arith.constant 2 : i32
    %c0_i32_58 = arith.constant 0 : i32
    %c0_i32_59 = arith.constant 0 : i32
    %79 = tpu.memref_slice %arg7[%c1_i32_55, %c0_i32_58, %c0_i32_59] : memref<4x128x128xbf16, #tpu.memory_space<any>> -> memref<1x128x128xbf16, #tpu.memory_space<any>>
    %80 = tpu.memref_squeeze %79 : memref<1x128x128xbf16, #tpu.memory_space<any>> -> memref<128x128xbf16, #tpu.memory_space<any>>
    %c0_i32_60 = arith.constant 0 : i32
    %c0_i32_61 = arith.constant 0 : i32
    %81 = tpu.memref_slice %arg14[%c1_i32_56, %c0_i32_60, %c0_i32_61] : memref<2x128x128xbf16, #tpu.memory_space<vmem>> -> memref<1x128x128xbf16, #tpu.memory_space<vmem>>
    %82 = tpu.memref_squeeze %81 : memref<1x128x128xbf16, #tpu.memory_space<vmem>> -> memref<128x128xbf16, #tpu.memory_space<vmem>>
    %83 = tpu.memref_slice %arg19[%c2_i32_57] : memref<7x!tpu.dma_semaphore, #tpu.memory_space<semaphore_mem>> -> memref<1x!tpu.dma_semaphore, #tpu.memory_space<semaphore_mem>>
    %84 = tpu.memref_squeeze %83 : memref<1x!tpu.dma_semaphore, #tpu.memory_space<semaphore_mem>> -> memref<!tpu.dma_semaphore, #tpu.memory_space<semaphore_mem>>
    tpu.wait_dma2 semaphore(%84 : memref<!tpu.dma_semaphore, #tpu.memory_space<semaphore_mem>>) src(%80 : memref<128x128xbf16, #tpu.memory_space<any>>) dst(%82 : memref<128x128xbf16, #tpu.memory_space<vmem>>)
    %c1_62 = arith.constant 1 : index
    %c0_63 = arith.constant 0 : index
    %c0_64 = arith.constant 0 : index
    %85 = vector.load %arg14[%c1_62, %c0_63, %c0_64] : memref<2x128x128xbf16, #tpu.memory_space<vmem>>, vector<1x128x128xbf16>
    %86 = vector.shape_cast %85 : vector<1x128x128xbf16> to vector<128x128xbf16>
    %87 = arith.truncf %78 : vector<8x128xf32> to vector<8x128xbf16>
    %cst_65 = arith.constant dense<0.000000e+00> : vector<8x128xf32>
    %88 = tpu.matmul %87, %86, %cst_65 {dimension_numbers = #tpu.dot_dimension_numbers<[1], [0], [0], [1], [0, 0, 1, 1], [], []>} : vector<8x128xbf16>, vector<128x128xbf16>, vector<8x128xf32> -> vector<8x128xf32>
    %c3_i32_66 = arith.constant 3 : i32
    %c1_i32_67 = arith.constant 1 : i32
    %c2_i32_68 = arith.constant 2 : i32
    %c0_i32_69 = arith.constant 0 : i32
    %c0_i32_70 = arith.constant 0 : i32
    %89 = tpu.memref_slice %arg7[%c3_i32_66, %c0_i32_69, %c0_i32_70] : memref<4x128x128xbf16, #tpu.memory_space<any>> -> memref<1x128x128xbf16, #tpu.memory_space<any>>
    %90 = tpu.memref_squeeze %89 : memref<1x128x128xbf16, #tpu.memory_space<any>> -> memref<128x128xbf16, #tpu.memory_space<any>>
    %c0_i32_71 = arith.constant 0 : i32
    %c0_i32_72 = arith.constant 0 : i32
    %91 = tpu.memref_slice %arg14[%c1_i32_67, %c0_i32_71, %c0_i32_72] : memref<2x128x128xbf16, #tpu.memory_space<vmem>> -> memref<1x128x128xbf16, #tpu.memory_space<vmem>>
    %92 = tpu.memref_squeeze %91 : memref<1x128x128xbf16, #tpu.memory_space<vmem>> -> memref<128x128xbf16, #tpu.memory_space<vmem>>
    %93 = tpu.memref_slice %arg19[%c2_i32_68] : memref<7x!tpu.dma_semaphore, #tpu.memory_space<semaphore_mem>> -> memref<1x!tpu.dma_semaphore, #tpu.memory_space<semaphore_mem>>
    %94 = tpu.memref_squeeze %93 : memref<1x!tpu.dma_semaphore, #tpu.memory_space<semaphore_mem>> -> memref<!tpu.dma_semaphore, #tpu.memory_space<semaphore_mem>>
    tpu.enqueue_dma source(%90 : memref<128x128xbf16, #tpu.memory_space<any>>) target(%92 : memref<128x128xbf16, #tpu.memory_space<vmem>>) target_semaphore(%94 : memref<!tpu.dma_semaphore, #tpu.memory_space<semaphore_mem>>)
    %cst_73 = arith.constant dense<0.000000e+00> : vector<128xf32>
    %95 = vector.multi_reduction <add>, %88, %cst_73 [0] : vector<8x128xf32> to vector<128xf32>
    %96 = vector.shape_cast %95 : vector<128xf32> to vector<1x128xf32>
    %cst_74 = arith.constant 1.250000e-01 : f32
    %97 = vector.broadcast %cst_74 : f32 to vector<1x128xf32>
    %98 = arith.mulf %96, %97 : vector<1x128xf32>
    %99 = vector.broadcast %98 : vector<1x128xf32> to vector<8x128xf32>
    %100 = arith.subf %88, %99 : vector<8x128xf32>
    %101 = arith.mulf %100, %100 : vector<8x128xf32>
    %cst_75 = arith.constant dense<0.000000e+00> : vector<128xf32>
    %102 = vector.multi_reduction <add>, %101, %cst_75 [0] : vector<8x128xf32> to vector<128xf32>
    %103 = vector.shape_cast %102 : vector<128xf32> to vector<1x128xf32>
    %cst_76 = arith.constant 1.250000e-01 : f32
    %104 = vector.broadcast %cst_76 : f32 to vector<1x128xf32>
    %105 = arith.mulf %103, %104 : vector<1x128xf32>
    %cst_77 = arith.constant 9.99999974E-6 : f32
    %106 = vector.broadcast %cst_77 : f32 to vector<1x128xf32>
    %107 = arith.addf %105, %106 : vector<1x128xf32>
    %108 = math.rsqrt %107 : vector<1x128xf32>
    %109 = arith.mulf %25, %108 : vector<1x128xf32>
    %110 = vector.broadcast %109 : vector<1x128xf32> to vector<8x128xf32>
    %111 = arith.mulf %100, %110 : vector<8x128xf32>
    %112 = vector.broadcast %26 : vector<1x128xf32> to vector<8x128xf32>
    %113 = arith.addf %111, %112 : vector<8x128xf32>
    %114 = arith.addf %113, %41 : vector<8x128xf32>
    %cst_78 = arith.constant 0.000000e+00 : f32
    %115 = vector.broadcast %cst_78 : f32 to vector<8x128xf32>
    %116 = arith.maximumf %114, %115 : vector<8x128xf32>
    %c3_i32_79 = arith.constant 3 : i32
    %117 = tpu.memref_slice %arg19[%c3_i32_79] : memref<7x!tpu.dma_semaphore, #tpu.memory_space<semaphore_mem>> -> memref<1x!tpu.dma_semaphore, #tpu.memory_space<semaphore_mem>>
    %118 = tpu.memref_squeeze %117 : memref<1x!tpu.dma_semaphore, #tpu.memory_space<semaphore_mem>> -> memref<!tpu.dma_semaphore, #tpu.memory_space<semaphore_mem>>
    tpu.wait_dma2 semaphore(%118 : memref<!tpu.dma_semaphore, #tpu.memory_space<semaphore_mem>>) src(%arg8 : memref<128x256xbf16, #tpu.memory_space<any>>) dst(%arg15 : memref<128x256xbf16, #tpu.memory_space<vmem>>)
    %c0_80 = arith.constant 0 : index
    %c0_81 = arith.constant 0 : index
    %119 = vector.load %arg15[%c0_80, %c0_81] : memref<128x256xbf16, #tpu.memory_space<vmem>>, vector<128x256xbf16>
    %120 = arith.truncf %116 : vector<8x128xf32> to vector<8x128xbf16>
    %cst_82 = arith.constant dense<0.000000e+00> : vector<8x256xf32>
    %121 = tpu.matmul %120, %119, %cst_82 {dimension_numbers = #tpu.dot_dimension_numbers<[1], [0], [0], [1], [0, 0, 1, 1], [], []>} : vector<8x128xbf16>, vector<128x256xbf16>, vector<8x256xf32> -> vector<8x256xf32>
    %c0_83 = arith.constant 0 : index
    %c0_84 = arith.constant 0 : index
    %122 = vector.load %arg4[%c0_83, %c0_84] : memref<1x256xf32, #tpu.memory_space<vmem>>, vector<1x256xf32>
    %123 = vector.broadcast %122 : vector<1x256xf32> to vector<8x256xf32>
    %124 = arith.addf %121, %123 : vector<8x256xf32>
    %125 = vector.extract_strided_slice %124 {offsets = [0, 0], sizes = [8, 128], strides = [1, 1]} : vector<8x256xf32> to vector<8x128xf32>
    %126 = vector.extract_strided_slice %124 {offsets = [0, 128], sizes = [8, 128], strides = [1, 1]} : vector<8x256xf32> to vector<8x128xf32>
    %cst_85 = arith.constant 5.000000e-01 : f32
    %127 = vector.broadcast %cst_85 : f32 to vector<8x128xf32>
    %128 = arith.mulf %127, %126 : vector<8x128xf32>
    %129 = math.exp %128 : vector<8x128xf32>
    %130 = arith.mulf %34, %129 : vector<8x128xf32>
    %131 = arith.addf %125, %130 : vector<8x128xf32>
    %c4_i32_86 = arith.constant 4 : i32
    %132 = tpu.memref_slice %arg19[%c4_i32_86] : memref<7x!tpu.dma_semaphore, #tpu.memory_space<semaphore_mem>> -> memref<1x!tpu.dma_semaphore, #tpu.memory_space<semaphore_mem>>
    %133 = tpu.memref_squeeze %132 : memref<1x!tpu.dma_semaphore, #tpu.memory_space<semaphore_mem>> -> memref<!tpu.dma_semaphore, #tpu.memory_space<semaphore_mem>>
    tpu.wait_dma2 semaphore(%133 : memref<!tpu.dma_semaphore, #tpu.memory_space<semaphore_mem>>) src(%arg9 : memref<128x128xbf16, #tpu.memory_space<any>>) dst(%arg16 : memref<128x128xbf16, #tpu.memory_space<vmem>>)
    %c5_i32_87 = arith.constant 5 : i32
    %134 = tpu.memref_slice %arg19[%c5_i32_87] : memref<7x!tpu.dma_semaphore, #tpu.memory_space<semaphore_mem>> -> memref<1x!tpu.dma_semaphore, #tpu.memory_space<semaphore_mem>>
    %135 = tpu.memref_squeeze %134 : memref<1x!tpu.dma_semaphore, #tpu.memory_space<semaphore_mem>> -> memref<!tpu.dma_semaphore, #tpu.memory_space<semaphore_mem>>
    tpu.wait_dma2 semaphore(%135 : memref<!tpu.dma_semaphore, #tpu.memory_space<semaphore_mem>>) src(%arg10 : memref<128x128xbf16, #tpu.memory_space<any>>) dst(%arg17 : memref<128x128xbf16, #tpu.memory_space<vmem>>)
    %c0_88 = arith.constant 0 : index
    %c0_89 = arith.constant 0 : index
    %136 = vector.load %arg16[%c0_88, %c0_89] : memref<128x128xbf16, #tpu.memory_space<vmem>>, vector<128x128xbf16>
    %137 = arith.truncf %131 : vector<8x128xf32> to vector<8x128xbf16>
    %cst_90 = arith.constant dense<0.000000e+00> : vector<8x128xf32>
    %138 = tpu.matmul %137, %136, %cst_90 {dimension_numbers = #tpu.dot_dimension_numbers<[1], [0], [0], [1], [0, 0, 1, 1], [], []>} : vector<8x128xbf16>, vector<128x128xbf16>, vector<8x128xf32> -> vector<8x128xf32>
    %c0_91 = arith.constant 0 : index
    %c0_92 = arith.constant 0 : index
    %139 = vector.load %arg17[%c0_91, %c0_92] : memref<128x128xbf16, #tpu.memory_space<vmem>>, vector<128x128xbf16>
    %140 = arith.truncf %33 : vector<8x128xf32> to vector<8x128xbf16>
    %cst_93 = arith.constant dense<0.000000e+00> : vector<8x128xf32>
    %141 = tpu.matmul %140, %139, %cst_93 {dimension_numbers = #tpu.dot_dimension_numbers<[1], [0], [0], [1], [0, 0, 1, 1], [], []>} : vector<8x128xbf16>, vector<128x128xbf16>, vector<8x128xf32> -> vector<8x128xf32>
    %142 = arith.addf %138, %141 : vector<8x128xf32>
    %143 = vector.broadcast %27 : vector<1x128xf32> to vector<8x128xf32>
    %144 = arith.addf %142, %143 : vector<8x128xf32>
    %c2_i32_94 = arith.constant 2 : i32
    %c0_i32_95 = arith.constant 0 : i32
    %c1_i32_96 = arith.constant 1 : i32
    %c0_i32_97 = arith.constant 0 : i32
    %c0_i32_98 = arith.constant 0 : i32
    %145 = tpu.memref_slice %arg7[%c2_i32_94, %c0_i32_97, %c0_i32_98] : memref<4x128x128xbf16, #tpu.memory_space<any>> -> memref<1x128x128xbf16, #tpu.memory_space<any>>
    %146 = tpu.memref_squeeze %145 : memref<1x128x128xbf16, #tpu.memory_space<any>> -> memref<128x128xbf16, #tpu.memory_space<any>>
    %c0_i32_99 = arith.constant 0 : i32
    %c0_i32_100 = arith.constant 0 : i32
    %147 = tpu.memref_slice %arg14[%c0_i32_95, %c0_i32_99, %c0_i32_100] : memref<2x128x128xbf16, #tpu.memory_space<vmem>> -> memref<1x128x128xbf16, #tpu.memory_space<vmem>>
    %148 = tpu.memref_squeeze %147 : memref<1x128x128xbf16, #tpu.memory_space<vmem>> -> memref<128x128xbf16, #tpu.memory_space<vmem>>
    %149 = tpu.memref_slice %arg19[%c1_i32_96] : memref<7x!tpu.dma_semaphore, #tpu.memory_space<semaphore_mem>> -> memref<1x!tpu.dma_semaphore, #tpu.memory_space<semaphore_mem>>
    %150 = tpu.memref_squeeze %149 : memref<1x!tpu.dma_semaphore, #tpu.memory_space<semaphore_mem>> -> memref<!tpu.dma_semaphore, #tpu.memory_space<semaphore_mem>>
    tpu.wait_dma2 semaphore(%150 : memref<!tpu.dma_semaphore, #tpu.memory_space<semaphore_mem>>) src(%146 : memref<128x128xbf16, #tpu.memory_space<any>>) dst(%148 : memref<128x128xbf16, #tpu.memory_space<vmem>>)
    %c0_101 = arith.constant 0 : index
    %c0_102 = arith.constant 0 : index
    %c0_103 = arith.constant 0 : index
    %151 = vector.load %arg14[%c0_101, %c0_102, %c0_103] : memref<2x128x128xbf16, #tpu.memory_space<vmem>>, vector<1x128x128xbf16>
    %152 = vector.shape_cast %151 : vector<1x128x128xbf16> to vector<128x128xbf16>
    %153 = arith.truncf %144 : vector<8x128xf32> to vector<8x128xbf16>
    %cst_104 = arith.constant dense<0.000000e+00> : vector<8x128xf32>
    %154 = tpu.matmul %153, %152, %cst_104 {dimension_numbers = #tpu.dot_dimension_numbers<[1], [0], [0], [1], [0, 0, 1, 1], [], []>} : vector<8x128xbf16>, vector<128x128xbf16>, vector<8x128xf32> -> vector<8x128xf32>
    %cst_105 = arith.constant dense<0.000000e+00> : vector<128xf32>
    %155 = vector.multi_reduction <add>, %154, %cst_105 [0] : vector<8x128xf32> to vector<128xf32>
    %156 = vector.shape_cast %155 : vector<128xf32> to vector<1x128xf32>
    %cst_106 = arith.constant 1.250000e-01 : f32
    %157 = vector.broadcast %cst_106 : f32 to vector<1x128xf32>
    %158 = arith.mulf %156, %157 : vector<1x128xf32>
    %159 = vector.broadcast %158 : vector<1x128xf32> to vector<8x128xf32>
    %160 = arith.subf %154, %159 : vector<8x128xf32>
    %161 = arith.mulf %160, %160 : vector<8x128xf32>
    %cst_107 = arith.constant dense<0.000000e+00> : vector<128xf32>
    %162 = vector.multi_reduction <add>, %161, %cst_107 [0] : vector<8x128xf32> to vector<128xf32>
    %163 = vector.shape_cast %162 : vector<128xf32> to vector<1x128xf32>
    %cst_108 = arith.constant 1.250000e-01 : f32
    %164 = vector.broadcast %cst_108 : f32 to vector<1x128xf32>
    %165 = arith.mulf %163, %164 : vector<1x128xf32>
    %cst_109 = arith.constant 9.99999974E-6 : f32
    %166 = vector.broadcast %cst_109 : f32 to vector<1x128xf32>
    %167 = arith.addf %165, %166 : vector<1x128xf32>
    %168 = math.rsqrt %167 : vector<1x128xf32>
    %169 = arith.mulf %28, %168 : vector<1x128xf32>
    %170 = vector.broadcast %169 : vector<1x128xf32> to vector<8x128xf32>
    %171 = arith.mulf %160, %170 : vector<8x128xf32>
    %172 = vector.broadcast %29 : vector<1x128xf32> to vector<8x128xf32>
    %173 = arith.addf %171, %172 : vector<8x128xf32>
    %cst_110 = arith.constant 0.000000e+00 : f32
    %174 = vector.broadcast %cst_110 : f32 to vector<8x128xf32>
    %175 = arith.maximumf %173, %174 : vector<8x128xf32>
    %c3_i32_111 = arith.constant 3 : i32
    %c1_i32_112 = arith.constant 1 : i32
    %c2_i32_113 = arith.constant 2 : i32
    %c0_i32_114 = arith.constant 0 : i32
    %c0_i32_115 = arith.constant 0 : i32
    %176 = tpu.memref_slice %arg7[%c3_i32_111, %c0_i32_114, %c0_i32_115] : memref<4x128x128xbf16, #tpu.memory_space<any>> -> memref<1x128x128xbf16, #tpu.memory_space<any>>
    %177 = tpu.memref_squeeze %176 : memref<1x128x128xbf16, #tpu.memory_space<any>> -> memref<128x128xbf16, #tpu.memory_space<any>>
    %c0_i32_116 = arith.constant 0 : i32
    %c0_i32_117 = arith.constant 0 : i32
    %178 = tpu.memref_slice %arg14[%c1_i32_112, %c0_i32_116, %c0_i32_117] : memref<2x128x128xbf16, #tpu.memory_space<vmem>> -> memref<1x128x128xbf16, #tpu.memory_space<vmem>>
    %179 = tpu.memref_squeeze %178 : memref<1x128x128xbf16, #tpu.memory_space<vmem>> -> memref<128x128xbf16, #tpu.memory_space<vmem>>
    %180 = tpu.memref_slice %arg19[%c2_i32_113] : memref<7x!tpu.dma_semaphore, #tpu.memory_space<semaphore_mem>> -> memref<1x!tpu.dma_semaphore, #tpu.memory_space<semaphore_mem>>
    %181 = tpu.memref_squeeze %180 : memref<1x!tpu.dma_semaphore, #tpu.memory_space<semaphore_mem>> -> memref<!tpu.dma_semaphore, #tpu.memory_space<semaphore_mem>>
    tpu.wait_dma2 semaphore(%181 : memref<!tpu.dma_semaphore, #tpu.memory_space<semaphore_mem>>) src(%177 : memref<128x128xbf16, #tpu.memory_space<any>>) dst(%179 : memref<128x128xbf16, #tpu.memory_space<vmem>>)
    %c1_118 = arith.constant 1 : index
    %c0_119 = arith.constant 0 : index
    %c0_120 = arith.constant 0 : index
    %182 = vector.load %arg14[%c1_118, %c0_119, %c0_120] : memref<2x128x128xbf16, #tpu.memory_space<vmem>>, vector<1x128x128xbf16>
    %183 = vector.shape_cast %182 : vector<1x128x128xbf16> to vector<128x128xbf16>
    %184 = arith.truncf %175 : vector<8x128xf32> to vector<8x128xbf16>
    %cst_121 = arith.constant dense<0.000000e+00> : vector<8x128xf32>
    %185 = tpu.matmul %184, %183, %cst_121 {dimension_numbers = #tpu.dot_dimension_numbers<[1], [0], [0], [1], [0, 0, 1, 1], [], []>} : vector<8x128xbf16>, vector<128x128xbf16>, vector<8x128xf32> -> vector<8x128xf32>
    %cst_122 = arith.constant dense<0.000000e+00> : vector<128xf32>
    %186 = vector.multi_reduction <add>, %185, %cst_122 [0] : vector<8x128xf32> to vector<128xf32>
    %187 = vector.shape_cast %186 : vector<128xf32> to vector<1x128xf32>
    %cst_123 = arith.constant 1.250000e-01 : f32
    %188 = vector.broadcast %cst_123 : f32 to vector<1x128xf32>
    %189 = arith.mulf %187, %188 : vector<1x128xf32>
    %190 = vector.broadcast %189 : vector<1x128xf32> to vector<8x128xf32>
    %191 = arith.subf %185, %190 : vector<8x128xf32>
    %192 = arith.mulf %191, %191 : vector<8x128xf32>
    %cst_124 = arith.constant dense<0.000000e+00> : vector<128xf32>
    %193 = vector.multi_reduction <add>, %192, %cst_124 [0] : vector<8x128xf32> to vector<128xf32>
    %194 = vector.shape_cast %193 : vector<128xf32> to vector<1x128xf32>
    %cst_125 = arith.constant 1.250000e-01 : f32
    %195 = vector.broadcast %cst_125 : f32 to vector<1x128xf32>
    %196 = arith.mulf %194, %195 : vector<1x128xf32>
    %cst_126 = arith.constant 9.99999974E-6 : f32
    %197 = vector.broadcast %cst_126 : f32 to vector<1x128xf32>
    %198 = arith.addf %196, %197 : vector<1x128xf32>
    %199 = math.rsqrt %198 : vector<1x128xf32>
    %200 = arith.mulf %30, %199 : vector<1x128xf32>
    %201 = vector.broadcast %200 : vector<1x128xf32> to vector<8x128xf32>
    %202 = arith.mulf %191, %201 : vector<8x128xf32>
    %203 = vector.broadcast %31 : vector<1x128xf32> to vector<8x128xf32>
    %204 = arith.addf %202, %203 : vector<8x128xf32>
    %205 = arith.addf %204, %144 : vector<8x128xf32>
    %cst_127 = arith.constant 0.000000e+00 : f32
    %206 = vector.broadcast %cst_127 : f32 to vector<8x128xf32>
    %207 = arith.maximumf %205, %206 : vector<8x128xf32>
    %c6_i32_128 = arith.constant 6 : i32
    %208 = tpu.memref_slice %arg19[%c6_i32_128] : memref<7x!tpu.dma_semaphore, #tpu.memory_space<semaphore_mem>> -> memref<1x!tpu.dma_semaphore, #tpu.memory_space<semaphore_mem>>
    %209 = tpu.memref_squeeze %208 : memref<1x!tpu.dma_semaphore, #tpu.memory_space<semaphore_mem>> -> memref<!tpu.dma_semaphore, #tpu.memory_space<semaphore_mem>>
    tpu.wait_dma2 semaphore(%209 : memref<!tpu.dma_semaphore, #tpu.memory_space<semaphore_mem>>) src(%arg11 : memref<128x128xbf16, #tpu.memory_space<any>>) dst(%arg18 : memref<128x128xbf16, #tpu.memory_space<vmem>>)
    %c0_129 = arith.constant 0 : index
    %c0_130 = arith.constant 0 : index
    %210 = vector.load %arg18[%c0_129, %c0_130] : memref<128x128xbf16, #tpu.memory_space<vmem>>, vector<128x128xbf16>
    %211 = arith.truncf %207 : vector<8x128xf32> to vector<8x128xbf16>
    %cst_131 = arith.constant dense<0.000000e+00> : vector<8x128xf32>
    %212 = tpu.matmul %211, %210, %cst_131 {dimension_numbers = #tpu.dot_dimension_numbers<[1], [0], [0], [1], [0, 0, 1, 1], [], []>} : vector<8x128xbf16>, vector<128x128xbf16>, vector<8x128xf32> -> vector<8x128xf32>
    %c0_132 = arith.constant 0 : index
    %c0_133 = arith.constant 0 : index
    %213 = vector.load %arg5[%c0_132, %c0_133] : memref<1x128xf32, #tpu.memory_space<vmem>>, vector<1x128xf32>
    %214 = vector.broadcast %213 : vector<1x128xf32> to vector<8x128xf32>
    %215 = arith.addf %212, %214 : vector<8x128xf32>
    %c0_134 = arith.constant 0 : index
    %c0_135 = arith.constant 0 : index
    %216 = vector.load %arg12[%c0_134, %c0_135] : memref<8x384xf32, #tpu.memory_space<vmem>>, vector<8x128xf32>
    tpu.vector_store %arg12[%c0_134, %c0_135], %215 {strides = array<i32>} : memref<8x384xf32, #tpu.memory_space<vmem>>, vector<8x128xf32>,
    %c0_136 = arith.constant 0 : index
    %c128 = arith.constant 128 : index
    %217 = vector.load %arg12[%c0_136, %c128] : memref<8x384xf32, #tpu.memory_space<vmem>>, vector<8x128xf32>
    tpu.vector_store %arg12[%c0_136, %c128], %125 {strides = array<i32>} : memref<8x384xf32, #tpu.memory_space<vmem>>, vector<8x128xf32>,
    %c0_137 = arith.constant 0 : index
    %c256 = arith.constant 256 : index
    %218 = vector.load %arg12[%c0_137, %c256] : memref<8x384xf32, #tpu.memory_space<vmem>>, vector<8x128xf32>
    tpu.vector_store %arg12[%c0_137, %c256], %126 {strides = array<i32>} : memref<8x384xf32, #tpu.memory_space<vmem>>, vector<8x128xf32>,
    return
  }
}

</mosaic_0001>

<llo_original>
// kernel: conditional_ghdvae_forward.1
$region0: #{conditional_ghdvae_forward.1}
  #allocation0 [shape = 'u32[]', space=smem, size = 0x4, offset = 0x4, fixed_abs, tag = 'smem constant byte address 0x4 - core index']
  #allocation1 [shape = 'u32[144,128]{1,0:T(1,128)}', space=vmem, size = 0x12000, scoped, tag = 'internal scratch']
  #allocation2 [shape = 'bf16[128,128]{1,0:T(8,128)(2,1)}', space=vmem, size = 0x8000, scoped, tag = 'scratch operand']
  #allocation3 [shape = 'bf16[2,128,128]{2,1,0:T(8,128)(2,1)}', space=vmem, size = 0x10000, scoped, tag = 'scratch operand']
  #allocation4 [shape = 'bf16[128,256]{1,0:T(8,128)(2,1)}', space=vmem, size = 0x10000, scoped, tag = 'scratch operand']
  #allocation5 [shape = 'bf16[128,128]{1,0:T(8,128)(2,1)}', space=vmem, size = 0x8000, scoped, tag = 'scratch operand']
  #allocation6 [shape = 'bf16[128,128]{1,0:T(8,128)(2,1)}', space=vmem, size = 0x8000, scoped, tag = 'scratch operand']
  #allocation7 [shape = 'bf16[128,128]{1,0:T(8,128)(2,1)}', space=vmem, size = 0x8000, scoped, tag = 'scratch operand']
  #allocation8 [shape = 's32[7]{0}', space=sflag, size = 0x1c, scoped, tag = 'scratch operand']
  #allocation13 [shape = 's32[]', space=sflag, size = 0x4, offset = 0, fixed_abs, tag = 'sflag constant byte address 0x0 - dummy sync flag']
  #allocation14 [shape = 's32[]', space=sflag, size = 0x4, offset = 0, fixed_abs, tag = 'sflag constant byte address 0x0 - dummy sync flag']
  #allocation15 [shape = 's32[]', space=sflag, size = 0x4, offset = 0, fixed_abs, tag = 'sflag constant byte address 0x0 - dummy sync flag']
  #allocation16 [shape = 'u32[]', space=smem, size = 0x4, offset = 0x44, fixed_abs, tag = 'smem constant byte address 0x44 - assertion arg 0']
  #allocation17 [shape = 'u32[]', space=smem, size = 0x4, offset = 0x48, fixed_abs, tag = 'smem constant byte address 0x48 - assertion arg 1']
  #allocation18 [shape = 's32[]', space=sflag, size = 0x4, offset = 0, fixed_abs, tag = 'sflag constant byte address 0x0 - dummy sync flag']
  #allocation19 [shape = 's32[]', space=sflag, size = 0x4, offset = 0, fixed_abs, tag = 'sflag constant byte address 0x0 - dummy sync flag']
  #allocation20 [shape = 's32[]', space=sflag, size = 0x4, offset = 0, fixed_abs, tag = 'sflag constant byte address 0x0 - dummy sync flag']
  #allocation21 [shape = 's32[]', space=sflag, size = 0x4, offset = 0, fixed_abs, tag = 'sflag constant byte address 0x0 - dummy sync flag']
  #allocation22 [shape = 's32[]', space=sflag, size = 0x4, offset = 0, fixed_abs, tag = 'sflag constant byte address 0x0 - dummy sync flag']
  #allocation23 [shape = 's32[]', space=sflag, size = 0x4, offset = 0, fixed_abs, tag = 'sflag constant byte address 0x0 - dummy sync flag']
  #allocation24 [shape = 's32[]', space=sflag, size = 0x4, offset = 0, fixed_abs, tag = 'sflag constant byte address 0x0 - dummy sync flag']
  #allocation25 [shape = 's32[]', space=sflag, size = 0x4, offset = 0, fixed_abs, tag = 'sflag constant byte address 0x0 - dummy sync flag']
  #allocation26 [shape = 's32[]', space=sflag, size = 0x4, offset = 0, fixed_abs, tag = 'sflag constant byte address 0x0 - dummy sync flag']
  #allocation27 [shape = 's32[]', space=sflag, size = 0x4, offset = 0, fixed_abs, tag = 'sflag constant byte address 0x0 - dummy sync flag']
  #allocation28 [shape = 's32[]', space=sflag, size = 0x4, offset = 0, fixed_abs, tag = 'sflag constant byte address 0x0 - dummy sync flag']
  #allocation29 [shape = 's32[]', space=sflag, size = 0x4, offset = 0, fixed_abs, tag = 'sflag constant byte address 0x0 - dummy sync flag']
  #allocation30 [shape = 's32[]', space=sflag, size = 0x4, offset = 0, fixed_abs, tag = 'sflag constant byte address 0x0 - dummy sync flag']
  #allocation31 [shape = 's32[]', space=sflag, size = 0x4, offset = 0, fixed_abs, tag = 'sflag constant byte address 0x0 - dummy sync flag']
  %s0 = inlined_call_operand.vmem [shape: f32[8,128], index: 0, kind: input, shape index: {}]
  %s1 = inlined_call_operand.vmem [shape: f32[8,128], index: 1, kind: input, shape index: {}]
  %s2 = inlined_call_operand.vmem [shape: f32[8,128], index: 2, kind: input, shape index: {}]
  %s3 = inlined_call_operand.hbm [shape: f32[10,128], index: 3, kind: input, shape index: {}]
  %s4 = inlined_call_operand.hbm [shape: f32[1,256], index: 4, kind: input, shape index: {}]
  %s5 = inlined_call_operand.vmem [shape: f32[1,128], index: 5, kind: input, shape index: {}]
  %s6 = inlined_call_operand.vmem [shape: bf16[128,128], index: 6, kind: input, shape index: {}]
  %s7 = inlined_call_operand.hbm [shape: bf16[4,128,128], index: 7, kind: input, shape index: {}]
  %s8 = inlined_call_operand.hbm [shape: bf16[128,256], index: 8, kind: input, shape index: {}]
  %s9 = inlined_call_operand.hbm [shape: bf16[128,128], index: 9, kind: input, shape index: {}]
  %s10 = inlined_call_operand.hbm [shape: bf16[128,128], index: 10, kind: input, shape index: {}]
  %s11 = inlined_call_operand.hbm [shape: bf16[128,128], index: 11, kind: input, shape index: {}]
  %s12 = inlined_call_operand.vmem [shape: f32[8,384], index: 12, kind: output, shape index: {}]
  %s13 = sld [smem:[#allocation0]]
  $region108: #{conditional_ghdvae_forward.1} parent=0
    _
  %s15 = ssub.s32 1, %s13
  %s16 = scalar_select 0, %s15, %s13
  $region1: #{conditional_ghdvae_forward.1} parent=0
    #allocation9 [shape = 'u8[8192]{0}', space=vmem, size = 0x2000, scoped, tag = 'input window, operand 3, single buffered']
    #allocation10 [shape = 's32[1]{0}', space=sflag, size = 0x4, scoped, tag = 'scoped memory for conditional_ghdvae_forward.1']
    #allocation11 [shape = 'u8[1024]{0}', space=vmem, size = 0x400, scoped, tag = 'input window, operand 4, single buffered']
    #allocation12 [shape = 's32[1]{0}', space=sflag, size = 0x4, scoped, tag = 'scoped memory for conditional_ghdvae_forward.1']
    %17 = vsyncpa [#allocation10], 0
    %18 = vsyncpa [#allocation12], 0
    // Predicated region
    $region2: #{conditional_ghdvae_forward.1} parent=1 // pred_check
      _
    $region3: #{conditional_ghdvae_forward.1} parent=1 // pred_check_branch
      %20 = sbr.rel (0) target = $region5
    $region4: #{conditional_ghdvae_forward.1} parent=1 // pred_region
      _
    $region5: #{conditional_ghdvae_forward.1} parent=1 // pred_fallthru
      _
    // Predicated region
    $region6: #{conditional_ghdvae_forward.1} parent=1 // pred_check
      _
    $region7: #{conditional_ghdvae_forward.1} parent=1 // pred_check_branch
      %22 = sbr.rel (0) target = $region9
    $region8: #{conditional_ghdvae_forward.1} parent=1 // pred_region
      _
    $region9: #{conditional_ghdvae_forward.1} parent=1 // pred_fallthru
      _
    // Predicated region
    $region10: #{conditional_ghdvae_forward.1} parent=1 // pred_check
      _
    $region11: #{conditional_ghdvae_forward.1} parent=1 // pred_check_branch
      %24 = sbr.rel (0) target = $region13
    $region12: #{conditional_ghdvae_forward.1} parent=1 // pred_region
      _
    $region13: #{conditional_ghdvae_forward.1} parent=1 // pred_fallthru
      _
    // Predicated region
    $region14: #{conditional_ghdvae_forward.1} parent=1 // pred_check
      _
    $region15: #{conditional_ghdvae_forward.1} parent=1 // pred_check_branch
      %26 = sbr.rel (0) target = $region17
    $region16: #{conditional_ghdvae_forward.1} parent=1 // pred_region
      %s28 = ssub.s32 256, 256
      %29 = vsyncadd [#allocation10], %s28
      %s30 = sshll.u32 [#allocation9], 4
      %s31 = int_to_ptr.vmem [resolvable:$true] %s30
      %36 = dma.hbm_to_vmem [thread:$0]  %s3, 256, %s31, [#allocation10], 128, 128, 8
    $region17: #{conditional_ghdvae_forward.1} parent=1 // pred_fallthru
      _
    // Predicated region
    $region18: #{conditional_ghdvae_forward.1} parent=1 // pred_check
      _
    $region19: #{conditional_ghdvae_forward.1} parent=1 // pred_check_branch
      %38 = sbr.rel (0) target = $region21
    $region20: #{conditional_ghdvae_forward.1} parent=1 // pred_region
      %s40 = ssub.s32 32, 32
      %41 = vsyncadd [#allocation12], %s40
      %s43 = sshll.u32 [#allocation11], 4
      %s44 = int_to_ptr.vmem [resolvable:$true] %s43
      %46 = dma.hbm_to_vmem [thread:$0]  %s4, 32, %s44, [#allocation12]
    $region21: #{conditional_ghdvae_forward.1} parent=1 // pred_fallthru
      _
    // Predicated region
    $region22: #{conditional_ghdvae_forward.1} parent=1 // pred_check
      _
    $region23: #{conditional_ghdvae_forward.1} parent=1 // pred_check_branch
      %48 = sbr.rel (0) target = $region25
    $region24: #{conditional_ghdvae_forward.1} parent=1 // pred_region
      _
    $region25: #{conditional_ghdvae_forward.1} parent=1 // pred_fallthru
      _
    // Predicated region
    $region26: #{conditional_ghdvae_forward.1} parent=1 // pred_check
      _
    $region27: #{conditional_ghdvae_forward.1} parent=1 // pred_check_branch
      %50 = sbr.rel (0) target = $region29
    $region28: #{conditional_ghdvae_forward.1} parent=1 // pred_region
      %51 = dma.done [#allocation10], 256
    $region29: #{conditional_ghdvae_forward.1} parent=1 // pred_fallthru
      _
    // Predicated region
    $region30: #{conditional_ghdvae_forward.1} parent=1 // pred_check
      _
    $region31: #{conditional_ghdvae_forward.1} parent=1 // pred_check_branch
      %53 = sbr.rel (0) target = $region33
    $region32: #{conditional_ghdvae_forward.1} parent=1 // pred_region
      %54 = dma.done [#allocation12], 32
    $region33: #{conditional_ghdvae_forward.1} parent=1 // pred_fallthru
      _
    %p57 = scmp.lt.u32.totalorder 64, 8
    %p58 = pneg %p57
    // Predicated region
    $region34: #{conditional_ghdvae_forward.1} parent=1 // pred_check
      _
    $region35: #{conditional_ghdvae_forward.1} parent=1 // pred_check_branch
      %60 = sbr.rel (%p57) target = $region37
    $region36: #{conditional_ghdvae_forward.1} parent=1 // pred_region
      %s76 = sand.u32 64, 7
      %p77 = scmp.eq.s32.totalorder %s76, 0
      // Predicated region
      $region49: #{conditional_ghdvae_forward.1} parent=36 // pred_check
        %p78 = pneg %p77
      $region50: #{conditional_ghdvae_forward.1} parent=36 // pred_check_branch
        %80 = sbr.rel (%p78) target = $region52
      $region51: #{conditional_ghdvae_forward.1} parent=36 // pred_region
        loop: start=0, step=1, limit=1
        $region53: #{conditional_ghdvae_forward.1} parent=51 // loop_pre_header
          _
        $region54: #{conditional_ghdvae_forward.1} parent=51 // loop_header
          %s82 = sphi 0, %s86
          %p83 = scmp.ge.s32.totalorder %s82, 1
          %s87 = sphi %s6, %s6
          %s88 = sphi [#allocation2], [#allocation2]
        $region55: #{conditional_ghdvae_forward.1} parent=51 // loop_header_branch
          %85 = sbr.rel (%p83) target = $region59
        $region56: #{conditional_ghdvae_forward.1} parent=51 // loop_body
          %v89 = vld [vmem:[%s87] sm:$0xff]
          %90 = vst [vmem:[%s88] sm:$0xff] %v89
          %v91 = vld [vmem:[%s87 + $0x8] sm:$0xff]
          %92 = vst [vmem:[%s88 + $0x8] sm:$0xff] %v91
          %v93 = vld [vmem:[%s87 + $0x10] sm:$0xff]
          %94 = vst [vmem:[%s88 + $0x10] sm:$0xff] %v93
          %v95 = vld [vmem:[%s87 + $0x18] sm:$0xff]
          %96 = vst [vmem:[%s88 + $0x18] sm:$0xff] %v95
          %v97 = vld [vmem:[%s87 + $0x20] sm:$0xff]
          %98 = vst [vmem:[%s88 + $0x20] sm:$0xff] %v97
          %v99 = vld [vmem:[%s87 + $0x28] sm:$0xff]
          %100 = vst [vmem:[%s88 + $0x28] sm:$0xff] %v99
          %v101 = vld [vmem:[%s87 + $0x30] sm:$0xff]
          %102 = vst [vmem:[%s88 + $0x30] sm:$0xff] %v101
          %v103 = vld [vmem:[%s87 + $0x38] sm:$0xff]
          %104 = vst [vmem:[%s88 + $0x38] sm:$0xff] %v103
        $region57: #{conditional_ghdvae_forward.1} parent=51 // loop_footer
          %s86 = sadd.s32 1, %s82
        $region58: #{conditional_ghdvae_forward.1} parent=51 // loop_footer_branch
          %81 = sbr.rel target = $region54
        $region59: #{conditional_ghdvae_forward.1} parent=51 // loop_exit
          _
      $region52: #{conditional_ghdvae_forward.1} parent=36 // pred_fallthru
        _
      %p105 = pneg %p77
      // Predicated region
      $region60: #{conditional_ghdvae_forward.1} parent=36 // pred_check
        _
      $region61: #{conditional_ghdvae_forward.1} parent=36 // pred_check_branch
        %107 = sbr.rel (%p77) target = $region63
      $region62: #{conditional_ghdvae_forward.1} parent=36 // pred_region
        %s108 = sand.u32 64, 7
      $region63: #{conditional_ghdvae_forward.1} parent=36 // pred_fallthru
        _
    $region37: #{conditional_ghdvae_forward.1} parent=1 // pred_fallthru
      _
    // Predicated region
    $region38: #{conditional_ghdvae_forward.1} parent=1 // pred_check
      %p61 = pneg %p57
    $region39: #{conditional_ghdvae_forward.1} parent=1 // pred_check_branch
      %63 = sbr.rel (%p61) target = $region41
    $region40: #{conditional_ghdvae_forward.1} parent=1 // pred_region
      %s64 = sshll.u32 1, 64
      %s65 = ssub.s32 %s64, 1
      loop: start=0, step=1, limit=1
      $region42: #{conditional_ghdvae_forward.1} parent=40 // loop_pre_header
        _
      $region43: #{conditional_ghdvae_forward.1} parent=40 // loop_header
        %s67 = sphi 0, %s71
        %p68 = scmp.ge.s32.totalorder %s67, 1
        %s72 = sphi %s6, %s6
        %s73 = sphi [#allocation2], [#allocation2]
      $region44: #{conditional_ghdvae_forward.1} parent=40 // loop_header_branch
        %70 = sbr.rel (%p68) target = $region48
      $region45: #{conditional_ghdvae_forward.1} parent=40 // loop_body
        %v74 = vld [vmem:[%s72] sm:%s65]
        %75 = vst [vmem:[%s73] sm:%s65] %v74
      $region46: #{conditional_ghdvae_forward.1} parent=40 // loop_footer
        %s71 = sadd.s32 1, %s67
      $region47: #{conditional_ghdvae_forward.1} parent=40 // loop_footer_branch
        %66 = sbr.rel target = $region43
      $region48: #{conditional_ghdvae_forward.1} parent=40 // loop_exit
        _
    $region41: #{conditional_ghdvae_forward.1} parent=1 // pred_fallthru
      _
    // Predicated region
    $region64: #{conditional_ghdvae_forward.1} parent=1 // pred_check
      _
    $region65: #{conditional_ghdvae_forward.1} parent=1 // pred_check_branch
      %111 = sbr.rel (0) target = $region67
    $region66: #{conditional_ghdvae_forward.1} parent=1 // pred_region
      %112 = vsyncadd [#allocation8], 1024
    $region67: #{conditional_ghdvae_forward.1} parent=1 // pred_fallthru
      _
    %s113 = scalar_lea.sflag [#allocation8], 1
    // Predicated region
    $region68: #{conditional_ghdvae_forward.1} parent=1 // pred_check
      _
    $region69: #{conditional_ghdvae_forward.1} parent=1 // pred_check_branch
      %115 = sbr.rel target = $region71
    $region70: #{conditional_ghdvae_forward.1} parent=1 // pred_region
      %116 = sst [smem:[#allocation16]] [#allocation15]
      %117 = sst [smem:[#allocation17]] [#allocation14]
    $region71: #{conditional_ghdvae_forward.1} parent=1 // pred_fallthru
      _
    %119 = shalt.err (0)
    %s121 = sshll.u32 [#allocation3], 4
    %s122 = int_to_ptr.vmem [resolvable:$true] %s121
    %124 = dma.hbm_to_vmem [thread:$0]  %s7, 1024, %s122, %s113
    %s125 = scalar_lea.hbm %s7, 1024
    %s126 = scalar_lea.vmem [#allocation3], 64
    %s127 = scalar_lea.sflag [#allocation8], 2
    // Predicated region
    $region72: #{conditional_ghdvae_forward.1} parent=1 // pred_check
      _
    $region73: #{conditional_ghdvae_forward.1} parent=1 // pred_check_branch
      %129 = sbr.rel target = $region75
    $region74: #{conditional_ghdvae_forward.1} parent=1 // pred_region
      %130 = sst [smem:[#allocation16]] [#allocation19]
      %131 = sst [smem:[#allocation17]] [#allocation18]
    $region75: #{conditional_ghdvae_forward.1} parent=1 // pred_fallthru
      _
    %133 = shalt.err (0)
    %s135 = sshll.u32 %s126, 4
    %s136 = int_to_ptr.vmem [resolvable:$true] %s135
    %138 = dma.hbm_to_vmem [thread:$0]  %s125, 1024, %s136, %s127
    %s139 = scalar_lea.sflag [#allocation8], 3
    // Predicated region
    $region76: #{conditional_ghdvae_forward.1} parent=1 // pred_check
      _
    $region77: #{conditional_ghdvae_forward.1} parent=1 // pred_check_branch
      %141 = sbr.rel target = $region79
    $region78: #{conditional_ghdvae_forward.1} parent=1 // pred_region
      %142 = sst [smem:[#allocation16]] [#allocation21]
      %143 = sst [smem:[#allocation17]] [#allocation20]
    $region79: #{conditional_ghdvae_forward.1} parent=1 // pred_fallthru
      _
    %145 = shalt.err (0)
    %s147 = sshll.u32 [#allocation4], 4
    %s148 = int_to_ptr.vmem [resolvable:$true] %s147
    %150 = dma.hbm_to_vmem [thread:$0]  %s8, 2048, %s148, %s139
    %s151 = scalar_lea.sflag [#allocation8], 4
    // Predicated region
    $region80: #{conditional_ghdvae_forward.1} parent=1 // pred_check
      _
    $region81: #{conditional_ghdvae_forward.1} parent=1 // pred_check_branch
      %153 = sbr.rel target = $region83
    $region82: #{conditional_ghdvae_forward.1} parent=1 // pred_region
      %154 = sst [smem:[#allocation16]] [#allocation23]
      %155 = sst [smem:[#allocation17]] [#allocation22]
    $region83: #{conditional_ghdvae_forward.1} parent=1 // pred_fallthru
      _
    %157 = shalt.err (0)
    %s159 = sshll.u32 [#allocation5], 4
    %s160 = int_to_ptr.vmem [resolvable:$true] %s159
    %162 = dma.hbm_to_vmem [thread:$0]  %s9, 1024, %s160, %s151
    %s163 = scalar_lea.sflag [#allocation8], 5
    // Predicated region
    $region84: #{conditional_ghdvae_forward.1} parent=1 // pred_check
      _
    $region85: #{conditional_ghdvae_forward.1} parent=1 // pred_check_branch
      %165 = sbr.rel target = $region87
    $region86: #{conditional_ghdvae_forward.1} parent=1 // pred_region
      %166 = sst [smem:[#allocation16]] [#allocation25]
      %167 = sst [smem:[#allocation17]] [#allocation24]
    $region87: #{conditional_ghdvae_forward.1} parent=1 // pred_fallthru
      _
    %169 = shalt.err (0)
    %s171 = sshll.u32 [#allocation6], 4
    %s172 = int_to_ptr.vmem [resolvable:$true] %s171
    %174 = dma.hbm_to_vmem [thread:$0]  %s10, 1024, %s172, %s163
    %s175 = scalar_lea.sflag [#allocation8], 6
    // Predicated region
    $region88: #{conditional_ghdvae_forward.1} parent=1 // pred_check
      _
    $region89: #{conditional_ghdvae_forward.1} parent=1 // pred_check_branch
      %177 = sbr.rel target = $region91
    $region90: #{conditional_ghdvae_forward.1} parent=1 // pred_region
      %178 = sst [smem:[#allocation16]] [#allocation27]
      %179 = sst [smem:[#allocation17]] [#allocation26]
    $region91: #{conditional_ghdvae_forward.1} parent=1 // pred_fallthru
      _
    %181 = shalt.err (0)
    %s183 = sshll.u32 [#allocation7], 4
    %s184 = int_to_ptr.vmem [resolvable:$true] %s183
    %186 = dma.hbm_to_vmem [thread:$0]  %s11, 1024, %s184, %s175
    %v187 = vld [vmem:[#allocation9] sm:$0x1]
    %v188 = vld [vmem:[#allocation9 + $0x1] sm:$0x1]
    %v189 = vld [vmem:[#allocation9 + $0x2] sm:$0x1]
    %v190 = vld [vmem:[#allocation9 + $0x3] sm:$0x1]
    %v191 = vld [vmem:[#allocation9 + $0x4] sm:$0x1]
    %v192 = vld [vmem:[#allocation9 + $0x5] sm:$0x1]
    %v193 = vld [vmem:[#allocation9 + $0x6] sm:$0x1]
    %v194 = vld [vmem:[#allocation9 + $0x7] sm:$0x1]
    %v195 = vld [vmem:[#allocation9 + $0x8] sm:$0x1]
    %v196 = vld [vmem:[#allocation9 + $0x9] sm:$0x1]
    %v197 = vld [vmem:[%s0] sm:$0xff]
    %v198 = vld [vmem:[%s1] sm:$0xff]
    %v199 = vld [vmem:[%s2] sm:$0xff]
    %s200 = smul.u32 4, 16
    %s201 = smul.u32 %s200, 1
    %s202 = sshll.u32 %s201, 4
    %203 = dma.done [#allocation8], %s202
    %v204 = vld [vmem:[#allocation2] sm:$0xf]
    %v205 = vld [vmem:[#allocation2 + $0x4] sm:$0xf]
    %v206 = vld [vmem:[#allocation2 + $0x8] sm:$0xf]
    %v207 = vld [vmem:[#allocation2 + $0xc] sm:$0xf]
    %v208 = vld [vmem:[#allocation2 + $0x10] sm:$0xf]
    %v209 = vld [vmem:[#allocation2 + $0x14] sm:$0xf]
    %v210 = vld [vmem:[#allocation2 + $0x18] sm:$0xf]
    %v211 = vld [vmem:[#allocation2 + $0x1c] sm:$0xf]
    %v212 = vld [vmem:[#allocation2 + $0x20] sm:$0xf]
    %v213 = vld [vmem:[#allocation2 + $0x24] sm:$0xf]
    %v214 = vld [vmem:[#allocation2 + $0x28] sm:$0xf]
    %v215 = vld [vmem:[#allocation2 + $0x2c] sm:$0xf]
    %v216 = vld [vmem:[#allocation2 + $0x30] sm:$0xf]
    %v217 = vld [vmem:[#allocation2 + $0x34] sm:$0xf]
    %v218 = vld [vmem:[#allocation2 + $0x38] sm:$0xf]
    %v219 = vld [vmem:[#allocation2 + $0x3c] sm:$0xf]
    %v220 = vpack.c.bf16 %v197, %v197
    %v221 = vlaneseq
    %v222 = vshrl.u32 %v221, 7
    %v223 = vsub.s32 0, %v222
    %v224 = vrot.slane %v187, %v223
    %v241 = vunpack.c.l.b16 %v204
    %v242 = vunpack.c.l.b16 %v205
    %v243 = vunpack.c.l.b16 %v206
    %v244 = vunpack.c.l.b16 %v207
    %v245 = vunpack.c.l.b16 %v208
    %v246 = vunpack.c.l.b16 %v209
    %v247 = vunpack.c.l.b16 %v210
    %v248 = vunpack.c.l.b16 %v211
    %v249 = vunpack.c.l.b16 %v212
    %v250 = vunpack.c.l.b16 %v213
    %v251 = vunpack.c.l.b16 %v214
    %v252 = vunpack.c.l.b16 %v215
    %v253 = vunpack.c.l.b16 %v216
    %v254 = vunpack.c.l.b16 %v217
    %v255 = vunpack.c.l.b16 %v218
    %v256 = vunpack.c.l.b16 %v219
    %v257 = vpack.c.b16 %v242, %v241
    %v258 = vpack.c.b16 %v244, %v243
    %v259 = vpack.c.b16 %v246, %v245
    %v260 = vpack.c.b16 %v248, %v247
    %v261 = vpack.c.b16 %v250, %v249
    %v262 = vpack.c.b16 %v252, %v251
    %v263 = vpack.c.b16 %v254, %v253
    %v264 = vpack.c.b16 %v256, %v255
    %273 = vmatprep.subr.bf16.mxu0 0
    %274 = vmatpush1.bf16.msra.mxu0 %v264
    %275 = vmatprep.subr.bf16.mxu0 0
    %276 = vmatpush1.bf16.msra.mxu0 %v263
    %277 = vmatprep.subr.bf16.mxu0 0
    %278 = vmatpush1.bf16.msra.mxu0 %v262
    %279 = vmatprep.subr.bf16.mxu0 0
    %280 = vmatpush1.bf16.msra.mxu0 %v261
    %281 = vmatprep.subr.bf16.mxu0 0
    %282 = vmatpush1.bf16.msra.mxu0 %v260
    %283 = vmatprep.subr.bf16.mxu0 0
    %284 = vmatpush1.bf16.msra.mxu0 %v259
    %285 = vmatprep.subr.bf16.mxu0 0
    %286 = vmatpush1.bf16.msra.mxu0 %v258
    %287 = vmatprep.subr.bf16.mxu0 0
    %288 = vmatpush1.bf16.msra.mxu0 %v257
    %289 = vmatprep.subr.bf16.mxu0 0
    %290 = vmatpush2.bf16.msra.mxu0 0
    %291 = vmatprep.subr.bf16.mxu0 0
    %292 = vmatpush2.bf16.msra.mxu0 0
    %293 = vmatprep.subr.bf16.mxu0 0
    %294 = vmatpush2.bf16.msra.mxu0 0
    %295 = vmatprep.subr.bf16.mxu0 0
    %296 = vmatpush2.bf16.msra.mxu0 0
    %297 = vmatprep.subr.bf16.mxu0 0
    %298 = vmatpush2.bf16.msra.mxu0 0
    %299 = vmatprep.subr.bf16.mxu0 0
    %300 = vmatpush2.bf16.msra.mxu0 0
    %301 = vmatprep.subr.bf16.mxu0 0
    %302 = vmatpush2.bf16.msra.mxu0 0
    %303 = vmatprep.subr.bf16.mxu0 0
    %304 = vmatpush2.bf16.msra.mxu0 0
    %305 = vmatprep.mubr.bf16.mxu0 0
    %306 = vmatmul.mubr.bf16.gmra.mxu0 %v220
    %v307 = vpop.f32.mrf.mxu0
    %v308 = vadd.f32 %v224, %v307
    %v309 = vpop.f32.mrf.mxu0
    %v310 = vpop.f32.mrf.mxu0
    %v311 = vpop.f32.mrf.mxu0
    %312 = vdwg.mxu0
    %s313 = sshll.u32 %s201, 4
    %314 = dma.done %s113, %s313
    %v315 = vld [vmem:[#allocation3] sm:$0xf]
    %v316 = vld [vmem:[#allocation3 + $0x4] sm:$0xf]
    %v317 = vld [vmem:[#allocation3 + $0x8] sm:$0xf]
    %v318 = vld [vmem:[#allocation3 + $0xc] sm:$0xf]
    %v319 = vld [vmem:[#allocation3 + $0x10] sm:$0xf]
    %v320 = vld [vmem:[#allocation3 + $0x14] sm:$0xf]
    %v321 = vld [vmem:[#allocation3 + $0x18] sm:$0xf]
    %v322 = vld [vmem:[#allocation3 + $0x1c] sm:$0xf]
    %v323 = vld [vmem:[#allocation3 + $0x20] sm:$0xf]
    %v324 = vld [vmem:[#allocation3 + $0x24] sm:$0xf]
    %v325 = vld [vmem:[#allocation3 + $0x28] sm:$0xf]
    %v326 = vld [vmem:[#allocation3 + $0x2c] sm:$0xf]
    %v327 = vld [vmem:[#allocation3 + $0x30] sm:$0xf]
    %v328 = vld [vmem:[#allocation3 + $0x34] sm:$0xf]
    %v329 = vld [vmem:[#allocation3 + $0x38] sm:$0xf]
    %v330 = vld [vmem:[#allocation3 + $0x3c] sm:$0xf]
    %v331 = vpack.c.bf16 %v308, %v308
    %v348 = vunpack.c.l.b16 %v315
    %v349 = vunpack.c.l.b16 %v316
    %v350 = vunpack.c.l.b16 %v317
    %v351 = vunpack.c.l.b16 %v318
    %v352 = vunpack.c.l.b16 %v319
    %v353 = vunpack.c.l.b16 %v320
    %v354 = vunpack.c.l.b16 %v321
    %v355 = vunpack.c.l.b16 %v322
    %v356 = vunpack.c.l.b16 %v323
    %v357 = vunpack.c.l.b16 %v324
    %v358 = vunpack.c.l.b16 %v325
    %v359 = vunpack.c.l.b16 %v326
    %v360 = vunpack.c.l.b16 %v327
    %v361 = vunpack.c.l.b16 %v328
    %v362 = vunpack.c.l.b16 %v329
    %v363 = vunpack.c.l.b16 %v330
    %v364 = vpack.c.b16 %v349, %v348
    %v365 = vpack.c.b16 %v351, %v350
    %v366 = vpack.c.b16 %v353, %v352
    %v367 = vpack.c.b16 %v355, %v354
    %v368 = vpack.c.b16 %v357, %v356
    %v369 = vpack.c.b16 %v359, %v358
    %v370 = vpack.c.b16 %v361, %v360
    %v371 = vpack.c.b16 %v363, %v362
    %380 = vmatprep.subr.bf16.mxu0 0
    %381 = vmatpush1.bf16.msra.mxu0 %v371
    %382 = vmatprep.subr.bf16.mxu0 0
    %383 = vmatpush1.bf16.msra.mxu0 %v370
    %384 = vmatprep.subr.bf16.mxu0 0
    %385 = vmatpush1.bf16.msra.mxu0 %v369
    %386 = vmatprep.subr.bf16.mxu0 0
    %387 = vmatpush1.bf16.msra.mxu0 %v368
    %388 = vmatprep.subr.bf16.mxu0 0
    %389 = vmatpush1.bf16.msra.mxu0 %v367
    %390 = vmatprep.subr.bf16.mxu0 0
    %391 = vmatpush1.bf16.msra.mxu0 %v366
    %392 = vmatprep.subr.bf16.mxu0 0
    %393 = vmatpush1.bf16.msra.mxu0 %v365
    %394 = vmatprep.subr.bf16.mxu0 0
    %395 = vmatpush1.bf16.msra.mxu0 %v364
    %396 = vmatprep.subr.bf16.mxu0 0
    %397 = vmatpush2.bf16.msra.mxu0 0
    %398 = vmatprep.subr.bf16.mxu0 0
    %399 = vmatpush2.bf16.msra.mxu0 0
    %400 = vmatprep.subr.bf16.mxu0 0
    %401 = vmatpush2.bf16.msra.mxu0 0
    %402 = vmatprep.subr.bf16.mxu0 0
    %403 = vmatpush2.bf16.msra.mxu0 0
    %404 = vmatprep.subr.bf16.mxu0 0
    %405 = vmatpush2.bf16.msra.mxu0 0
    %406 = vmatprep.subr.bf16.mxu0 0
    %407 = vmatpush2.bf16.msra.mxu0 0
    %408 = vmatprep.subr.bf16.mxu0 0
    %409 = vmatpush2.bf16.msra.mxu0 0
    %410 = vmatprep.subr.bf16.mxu0 0
    %411 = vmatpush2.bf16.msra.mxu0 0
    %412 = vmatprep.mubr.bf16.mxu0 0
    %413 = vmatmul.mubr.bf16.gmra.mxu0 %v331
    %v414 = vpop.f32.mrf.mxu0
    %v415 = vadd.f32 0.0, %v414
    %v416 = vpop.f32.mrf.mxu0
    %v417 = vpop.f32.mrf.mxu0
    %v418 = vpop.f32.mrf.mxu0
    %419 = vdwg.mxu0
    %s420 = scalar_lea.hbm %s7, 2048
    // Predicated region
    $region92: #{conditional_ghdvae_forward.1} parent=1 // pred_check
      _
    $region93: #{conditional_ghdvae_forward.1} parent=1 // pred_check_branch
      %422 = sbr.rel target = $region95
    $region94: #{conditional_ghdvae_forward.1} parent=1 // pred_region
      %423 = sst [smem:[#allocation16]] [#allocation29]
      %424 = sst [smem:[#allocation17]] [#allocation28]
    $region95: #{conditional_ghdvae_forward.1} parent=1 // pred_fallthru
      _
    %426 = shalt.err (0)
    %s428 = sshll.u32 [#allocation3], 4
    %s429 = int_to_ptr.vmem [resolvable:$true] %s428
    %431 = dma.hbm_to_vmem [thread:$0]  %s420, 1024, %s429, %s113
    %v432 = vrot.slane %v415, 4
    %v433 = vadd.f32 %v415, %v432
    %v434 = vrot.slane %v433, 2
    %v435 = vadd.f32 %v433, %v434
    %v436 = vrot.slane %v435, 1
    %v437 = vadd.f32 %v435, %v436
    %v438 = vmul.f32 %v437, 0.125
    %v439 = vsub.f32 %v415, %v438
    %v440 = vmul.f32 %v439, %v439
    %v441 = vrot.slane %v440, 4
    %v442 = vadd.f32 %v440, %v441
    %v443 = vrot.slane %v442, 2
    %v444 = vadd.f32 %v442, %v443
    %v445 = vrot.slane %v444, 1
    %v446 = vadd.f32 %v444, %v445
    %v447 = vmul.f32 %v446, 0.125
    %v448 = vadd.f32 %v447, 1e-05
    %v449 = vrsqrt.pop %v448
    %v450 = vmul.f32 %v188, %v449
    %v451 = vlaneseq
    %v452 = vshrl.u32 %v451, 7
    %v453 = vsub.s32 0, %v452
    %v454 = vrot.slane %v450, %v453
    %v455 = vmul.f32 %v439, %v454
    %v456 = vlaneseq
    %v457 = vshrl.u32 %v456, 7
    %v458 = vsub.s32 0, %v457
    %v459 = vrot.slane %v189, %v458
    %v460 = vadd.f32 %v455, %v459
    %v461 = vmax.f32 %v460, 0.0
    %s462 = sshll.u32 %s201, 4
    %463 = dma.done %s127, %s462
    %v464 = vld [vmem:[%s126] sm:$0xf]
    %v465 = vld [vmem:[%s126 + $0x4] sm:$0xf]
    %v466 = vld [vmem:[%s126 + $0x8] sm:$0xf]
    %v467 = vld [vmem:[%s126 + $0xc] sm:$0xf]
    %v468 = vld [vmem:[%s126 + $0x10] sm:$0xf]
    %v469 = vld [vmem:[%s126 + $0x14] sm:$0xf]
    %v470 = vld [vmem:[%s126 + $0x18] sm:$0xf]
    %v471 = vld [vmem:[%s126 + $0x1c] sm:$0xf]
    %v472 = vld [vmem:[%s126 + $0x20] sm:$0xf]
    %v473 = vld [vmem:[%s126 + $0x24] sm:$0xf]
    %v474 = vld [vmem:[%s126 + $0x28] sm:$0xf]
    %v475 = vld [vmem:[%s126 + $0x2c] sm:$0xf]
    %v476 = vld [vmem:[%s126 + $0x30] sm:$0xf]
    %v477 = vld [vmem:[%s126 + $0x34] sm:$0xf]
    %v478 = vld [vmem:[%s126 + $0x38] sm:$0xf]
    %v479 = vld [vmem:[%s126 + $0x3c] sm:$0xf]
    %v480 = vpack.c.bf16 %v461, %v461
    %v497 = vunpack.c.l.b16 %v464
    %v498 = vunpack.c.l.b16 %v465
    %v499 = vunpack.c.l.b16 %v466
    %v500 = vunpack.c.l.b16 %v467
    %v501 = vunpack.c.l.b16 %v468
    %v502 = vunpack.c.l.b16 %v469
    %v503 = vunpack.c.l.b16 %v470
    %v504 = vunpack.c.l.b16 %v471
    %v505 = vunpack.c.l.b16 %v472
    %v506 = vunpack.c.l.b16 %v473
    %v507 = vunpack.c.l.b16 %v474
    %v508 = vunpack.c.l.b16 %v475
    %v509 = vunpack.c.l.b16 %v476
    %v510 = vunpack.c.l.b16 %v477
    %v511 = vunpack.c.l.b16 %v478
    %v512 = vunpack.c.l.b16 %v479
    %v513 = vpack.c.b16 %v498, %v497
    %v514 = vpack.c.b16 %v500, %v499
    %v515 = vpack.c.b16 %v502, %v501
    %v516 = vpack.c.b16 %v504, %v503
    %v517 = vpack.c.b16 %v506, %v505
    %v518 = vpack.c.b16 %v508, %v507
    %v519 = vpack.c.b16 %v510, %v509
    %v520 = vpack.c.b16 %v512, %v511
    %529 = vmatprep.subr.bf16.mxu0 0
    %530 = vmatpush1.bf16.msra.mxu0 %v520
    %531 = vmatprep.subr.bf16.mxu0 0
    %532 = vmatpush1.bf16.msra.mxu0 %v519
    %533 = vmatprep.subr.bf16.mxu0 0
    %534 = vmatpush1.bf16.msra.mxu0 %v518
    %535 = vmatprep.subr.bf16.mxu0 0
    %536 = vmatpush1.bf16.msra.mxu0 %v517
    %537 = vmatprep.subr.bf16.mxu0 0
    %538 = vmatpush1.bf16.msra.mxu0 %v516
    %539 = vmatprep.subr.bf16.mxu0 0
    %540 = vmatpush1.bf16.msra.mxu0 %v515
    %541 = vmatprep.subr.bf16.mxu0 0
    %542 = vmatpush1.bf16.msra.mxu0 %v514
    %543 = vmatprep.subr.bf16.mxu0 0
    %544 = vmatpush1.bf16.msra.mxu0 %v513
    %545 = vmatprep.subr.bf16.mxu0 0
    %546 = vmatpush2.bf16.msra.mxu0 0
    %547 = vmatprep.subr.bf16.mxu0 0
    %548 = vmatpush2.bf16.msra.mxu0 0
    %549 = vmatprep.subr.bf16.mxu0 0
    %550 = vmatpush2.bf16.msra.mxu0 0
    %551 = vmatprep.subr.bf16.mxu0 0
    %552 = vmatpush2.bf16.msra.mxu0 0
    %553 = vmatprep.subr.bf16.mxu0 0
    %554 = vmatpush2.bf16.msra.mxu0 0
    %555 = vmatprep.subr.bf16.mxu0 0
    %556 = vmatpush2.bf16.msra.mxu0 0
    %557 = vmatprep.subr.bf16.mxu0 0
    %558 = vmatpush2.bf16.msra.mxu0 0
    %559 = vmatprep.subr.bf16.mxu0 0
    %560 = vmatpush2.bf16.msra.mxu0 0
    %561 = vmatprep.mubr.bf16.mxu0 0
    %562 = vmatmul.mubr.bf16.gmra.mxu0 %v480
    %v563 = vpop.f32.mrf.mxu0
    %v564 = vadd.f32 0.0, %v563
    %v565 = vpop.f32.mrf.mxu0
    %v566 = vpop.f32.mrf.mxu0
    %v567 = vpop.f32.mrf.mxu0
    %568 = vdwg.mxu0
    %s569 = scalar_lea.hbm %s7, 3072
    // Predicated region
    $region96: #{conditional_ghdvae_forward.1} parent=1 // pred_check
      _
    $region97: #{conditional_ghdvae_forward.1} parent=1 // pred_check_branch
      %571 = sbr.rel target = $region99
    $region98: #{conditional_ghdvae_forward.1} parent=1 // pred_region
      %572 = sst [smem:[#allocation16]] [#allocation31]
      %573 = sst [smem:[#allocation17]] [#allocation30]
    $region99: #{conditional_ghdvae_forward.1} parent=1 // pred_fallthru
      _
    %575 = shalt.err (0)
    %s577 = sshll.u32 %s126, 4
    %s578 = int_to_ptr.vmem [resolvable:$true] %s577
    %580 = dma.hbm_to_vmem [thread:$0]  %s569, 1024, %s578, %s127
    %v581 = vrot.slane %v564, 4
    %v582 = vadd.f32 %v564, %v581
    %v583 = vrot.slane %v582, 2
    %v584 = vadd.f32 %v582, %v583
    %v585 = vrot.slane %v584, 1
    %v586 = vadd.f32 %v584, %v585
    %v587 = vmul.f32 %v586, 0.125
    %v588 = vsub.f32 %v564, %v587
    %v589 = vmul.f32 %v588, %v588
    %v590 = vrot.slane %v589, 4
    %v591 = vadd.f32 %v589, %v590
    %v592 = vrot.slane %v591, 2
    %v593 = vadd.f32 %v591, %v592
    %v594 = vrot.slane %v593, 1
    %v595 = vadd.f32 %v593, %v594
    %v596 = vmul.f32 %v595, 0.125
    %v597 = vadd.f32 %v596, 1e-05
    %v598 = vrsqrt.pop %v597
    %v599 = vmul.f32 %v190, %v598
    %v600 = vlaneseq
    %v601 = vshrl.u32 %v600, 7
    %v602 = vsub.s32 0, %v601
    %v603 = vrot.slane %v599, %v602
    %v604 = vmul.f32 %v588, %v603
    %v605 = vlaneseq
    %v606 = vshrl.u32 %v605, 7
    %v607 = vsub.s32 0, %v606
    %v608 = vrot.slane %v191, %v607
    %v609 = vadd.f32 %v604, %v608
    %v610 = vadd.f32 %v609, %v308
    %v611 = vmax.f32 %v610, 0.0
    %s612 = smul.u32 %s200, 2
    %s613 = sshll.u32 %s612, 4
    %614 = dma.done %s139, %s613
    %v615 = vld [vmem:[#allocation4] sm:$0xff]
    %v616 = vld [vmem:[#allocation4 + $0x8] sm:$0xff]
    %v617 = vld [vmem:[#allocation4 + $0x10] sm:$0xff]
    %v618 = vld [vmem:[#allocation4 + $0x18] sm:$0xff]
    %v619 = vld [vmem:[#allocation4 + $0x20] sm:$0xff]
    %v620 = vld [vmem:[#allocation4 + $0x28] sm:$0xff]
    %v621 = vld [vmem:[#allocation4 + $0x30] sm:$0xff]
    %v622 = vld [vmem:[#allocation4 + $0x38] sm:$0xff]
    %v623 = vld [vmem:[#allocation4 + $0x40] sm:$0xff]
    %v624 = vld [vmem:[#allocation4 + $0x48] sm:$0xff]
    %v625 = vld [vmem:[#allocation4 + $0x50] sm:$0xff]
    %v626 = vld [vmem:[#allocation4 + $0x58] sm:$0xff]
    %v627 = vld [vmem:[#allocation4 + $0x60] sm:$0xff]
    %v628 = vld [vmem:[#allocation4 + $0x68] sm:$0xff]
    %v629 = vld [vmem:[#allocation4 + $0x70] sm:$0xff]
    %v630 = vld [vmem:[#allocation4 + $0x78] sm:$0xff]
    %v631 = vpack.c.bf16 %v611, %v611
    %v632 = vld [vmem:[#allocation11] sm:$0x3]
    %v634 = vlaneseq
    %v635 = vshrl.u32 %v634, 7
    %v636 = vsub.s32 0, %v635
    %v637 = vrot.slane %v632, %v636
    %v638 = vlaneseq
    %v639 = vshrl.u32 %v638, 7
    %v640 = vsub.s32 1, %v639
    %v641 = vrot.slane %v632, %v640
    %v660 = vunpack.c.l.b16 %v615
    %v661 = vunpack.c.h.b16 %v615
    %v662 = vunpack.c.l.b16 %v616
    %v663 = vunpack.c.h.b16 %v616
    %v664 = vunpack.c.l.b16 %v617
    %v665 = vunpack.c.h.b16 %v617
    %v666 = vunpack.c.l.b16 %v618
    %v667 = vunpack.c.h.b16 %v618
    %v668 = vunpack.c.l.b16 %v619
    %v669 = vunpack.c.h.b16 %v619
    %v670 = vunpack.c.l.b16 %v620
    %v671 = vunpack.c.h.b16 %v620
    %v672 = vunpack.c.l.b16 %v621
    %v673 = vunpack.c.h.b16 %v621
    %v674 = vunpack.c.l.b16 %v622
    %v675 = vunpack.c.h.b16 %v622
    %v676 = vunpack.c.l.b16 %v623
    %v677 = vunpack.c.h.b16 %v623
    %v678 = vunpack.c.l.b16 %v624
    %v679 = vunpack.c.h.b16 %v624
    %v680 = vunpack.c.l.b16 %v625
    %v681 = vunpack.c.h.b16 %v625
    %v682 = vunpack.c.l.b16 %v626
    %v683 = vunpack.c.h.b16 %v626
    %v684 = vunpack.c.l.b16 %v627
    %v685 = vunpack.c.h.b16 %v627
    %v686 = vunpack.c.l.b16 %v628
    %v687 = vunpack.c.h.b16 %v628
    %v688 = vunpack.c.l.b16 %v629
    %v689 = vunpack.c.h.b16 %v629
    %v690 = vunpack.c.l.b16 %v630
    %v691 = vunpack.c.h.b16 %v630
    %v692 = vpack.c.b16 %v662, %v660
    %v693 = vpack.c.b16 %v663, %v661
    %v694 = vpack.c.b16 %v666, %v664
    %v695 = vpack.c.b16 %v667, %v665
    %v696 = vpack.c.b16 %v670, %v668
    %v697 = vpack.c.b16 %v671, %v669
    %v698 = vpack.c.b16 %v674, %v672
    %v699 = vpack.c.b16 %v675, %v673
    %v700 = vpack.c.b16 %v678, %v676
    %v701 = vpack.c.b16 %v679, %v677
    %v702 = vpack.c.b16 %v682, %v680
    %v703 = vpack.c.b16 %v683, %v681
    %v704 = vpack.c.b16 %v686, %v684
    %v705 = vpack.c.b16 %v687, %v685
    %v706 = vpack.c.b16 %v690, %v688
    %v707 = vpack.c.b16 %v691, %v689
    %724 = vmatprep.subr.bf16.mxu0 %v707
    %725 = vmatpush1.bf16.msra.mxu0 %v706
    %726 = vmatprep.subr.bf16.mxu0 %v705
    %727 = vmatpush1.bf16.msra.mxu0 %v704
    %728 = vmatprep.subr.bf16.mxu0 %v703
    %729 = vmatpush1.bf16.msra.mxu0 %v702
    %730 = vmatprep.subr.bf16.mxu0 %v701
    %731 = vmatpush1.bf16.msra.mxu0 %v700
    %732 = vmatprep.subr.bf16.mxu0 %v699
    %733 = vmatpush1.bf16.msra.mxu0 %v698
    %734 = vmatprep.subr.bf16.mxu0 %v697
    %735 = vmatpush1.bf16.msra.mxu0 %v696
    %736 = vmatprep.subr.bf16.mxu0 %v695
    %737 = vmatpush1.bf16.msra.mxu0 %v694
    %738 = vmatprep.subr.bf16.mxu0 %v693
    %739 = vmatpush1.bf16.msra.mxu0 %v692
    %740 = vmatprep.subr.bf16.mxu0 0
    %741 = vmatpush2.bf16.msra.mxu0 0
    %742 = vmatprep.subr.bf16.mxu0 0
    %743 = vmatpush2.bf16.msra.mxu0 0
    %744 = vmatprep.subr.bf16.mxu0 0
    %745 = vmatpush2.bf16.msra.mxu0 0
    %746 = vmatprep.subr.bf16.mxu0 0
    %747 = vmatpush2.bf16.msra.mxu0 0
    %748 = vmatprep.subr.bf16.mxu0 0
    %749 = vmatpush2.bf16.msra.mxu0 0
    %750 = vmatprep.subr.bf16.mxu0 0
    %751 = vmatpush2.bf16.msra.mxu0 0
    %752 = vmatprep.subr.bf16.mxu0 0
    %753 = vmatpush2.bf16.msra.mxu0 0
    %754 = vmatprep.subr.bf16.mxu0 0
    %755 = vmatpush2.bf16.msra.mxu0 0
    %756 = vmatprep.mubr.bf16.mxu0 0
    %757 = vmatmul.mubr.bf16.gmra.mxu0 %v631
    %v758 = vpop.f32.mrf.mxu0
    %v759 = vadd.f32 %v637, %v758
    %v760 = vpop.f32.mrf.mxu0
    %v761 = vadd.f32 %v641, %v760
    %v762 = vpop.f32.mrf.mxu0
    %v763 = vpop.f32.mrf.mxu0
    %764 = vdwg.mxu0
    %v765 = vmul.f32 %v761, 0.5
    %v766 = vmul.f32 %v765, 1.442695
    %v767 = vpow.pop %v766
    %v768 = vmul.f32 %v199, %v767
    %v769 = vadd.f32 %v759, %v768
    %s770 = sshll.u32 %s201, 4
    %771 = dma.done %s151, %s770
    %s772 = sshll.u32 %s201, 4
    %773 = dma.done %s163, %s772
    %v774 = vld [vmem:[#allocation5] sm:$0xf]
    %v775 = vld [vmem:[#allocation5 + $0x4] sm:$0xf]
    %v776 = vld [vmem:[#allocation5 + $0x8] sm:$0xf]
    %v777 = vld [vmem:[#allocation5 + $0xc] sm:$0xf]
    %v778 = vld [vmem:[#allocation5 + $0x10] sm:$0xf]
    %v779 = vld [vmem:[#allocation5 + $0x14] sm:$0xf]
    %v780 = vld [vmem:[#allocation5 + $0x18] sm:$0xf]
    %v781 = vld [vmem:[#allocation5 + $0x1c] sm:$0xf]
    %v782 = vld [vmem:[#allocation5 + $0x20] sm:$0xf]
    %v783 = vld [vmem:[#allocation5 + $0x24] sm:$0xf]
    %v784 = vld [vmem:[#allocation5 + $0x28] sm:$0xf]
    %v785 = vld [vmem:[#allocation5 + $0x2c] sm:$0xf]
    %v786 = vld [vmem:[#allocation5 + $0x30] sm:$0xf]
    %v787 = vld [vmem:[#allocation5 + $0x34] sm:$0xf]
    %v788 = vld [vmem:[#allocation5 + $0x38] sm:$0xf]
    %v789 = vld [vmem:[#allocation5 + $0x3c] sm:$0xf]
    %v790 = vpack.c.bf16 %v769, %v769
    %v791 = vld [vmem:[#allocation6] sm:$0xf]
    %v792 = vld [vmem:[#allocation6 + $0x4] sm:$0xf]
    %v793 = vld [vmem:[#allocation6 + $0x8] sm:$0xf]
    %v794 = vld [vmem:[#allocation6 + $0xc] sm:$0xf]
    %v795 = vld [vmem:[#allocation6 + $0x10] sm:$0xf]
    %v796 = vld [vmem:[#allocation6 + $0x14] sm:$0xf]
    %v797 = vld [vmem:[#allocation6 + $0x18] sm:$0xf]
    %v798 = vld [vmem:[#allocation6 + $0x1c] sm:$0xf]
    %v799 = vld [vmem:[#allocation6 + $0x20] sm:$0xf]
    %v800 = vld [vmem:[#allocation6 + $0x24] sm:$0xf]
    %v801 = vld [vmem:[#allocation6 + $0x28] sm:$0xf]
    %v802 = vld [vmem:[#allocation6 + $0x2c] sm:$0xf]
    %v803 = vld [vmem:[#allocation6 + $0x30] sm:$0xf]
    %v804 = vld [vmem:[#allocation6 + $0x34] sm:$0xf]
    %v805 = vld [vmem:[#allocation6 + $0x38] sm:$0xf]
    %v806 = vld [vmem:[#allocation6 + $0x3c] sm:$0xf]
    %v807 = vpack.c.bf16 %v198, %v198
    %v824 = vunpack.c.l.b16 %v791
    %v825 = vunpack.c.l.b16 %v792
    %v826 = vunpack.c.l.b16 %v793
    %v827 = vunpack.c.l.b16 %v794
    %v828 = vunpack.c.l.b16 %v795
    %v829 = vunpack.c.l.b16 %v796
    %v830 = vunpack.c.l.b16 %v797
    %v831 = vunpack.c.l.b16 %v798
    %v832 = vunpack.c.l.b16 %v799
    %v833 = vunpack.c.l.b16 %v800
    %v834 = vunpack.c.l.b16 %v801
    %v835 = vunpack.c.l.b16 %v802
    %v836 = vunpack.c.l.b16 %v803
    %v837 = vunpack.c.l.b16 %v804
    %v838 = vunpack.c.l.b16 %v805
    %v839 = vunpack.c.l.b16 %v806
    %v840 = vpack.c.b16 %v825, %v824
    %v841 = vpack.c.b16 %v827, %v826
    %v842 = vpack.c.b16 %v829, %v828
    %v843 = vpack.c.b16 %v831, %v830
    %v844 = vpack.c.b16 %v833, %v832
    %v845 = vpack.c.b16 %v835, %v834
    %v846 = vpack.c.b16 %v837, %v836
    %v847 = vpack.c.b16 %v839, %v838
    %856 = vmatprep.subr.bf16.mxu0 0
    %857 = vmatpush1.bf16.msra.mxu0 %v847
    %858 = vmatprep.subr.bf16.mxu0 0
    %859 = vmatpush1.bf16.msra.mxu0 %v846
    %860 = vmatprep.subr.bf16.mxu0 0
    %861 = vmatpush1.bf16.msra.mxu0 %v845
    %862 = vmatprep.subr.bf16.mxu0 0
    %863 = vmatpush1.bf16.msra.mxu0 %v844
    %864 = vmatprep.subr.bf16.mxu0 0
    %865 = vmatpush1.bf16.msra.mxu0 %v843
    %866 = vmatprep.subr.bf16.mxu0 0
    %867 = vmatpush1.bf16.msra.mxu0 %v842
    %868 = vmatprep.subr.bf16.mxu0 0
    %869 = vmatpush1.bf16.msra.mxu0 %v841
    %870 = vmatprep.subr.bf16.mxu0 0
    %871 = vmatpush1.bf16.msra.mxu0 %v840
    %872 = vmatprep.subr.bf16.mxu0 0
    %873 = vmatpush2.bf16.msra.mxu0 0
    %874 = vmatprep.subr.bf16.mxu0 0
    %875 = vmatpush2.bf16.msra.mxu0 0
    %876 = vmatprep.subr.bf16.mxu0 0
    %877 = vmatpush2.bf16.msra.mxu0 0
    %878 = vmatprep.subr.bf16.mxu0 0
    %879 = vmatpush2.bf16.msra.mxu0 0
    %880 = vmatprep.subr.bf16.mxu0 0
    %881 = vmatpush2.bf16.msra.mxu0 0
    %882 = vmatprep.subr.bf16.mxu0 0
    %883 = vmatpush2.bf16.msra.mxu0 0
    %884 = vmatprep.subr.bf16.mxu0 0
    %885 = vmatpush2.bf16.msra.mxu0 0
    %886 = vmatprep.subr.bf16.mxu0 0
    %887 = vmatpush2.bf16.msra.mxu0 0
    %888 = vmatprep.mubr.bf16.mxu0 0
    %889 = vmatmul.mubr.bf16.gmra.mxu0 %v807
    %v890 = vpop.f32.mrf.mxu0
    %v891 = vadd.f32 0.0, %v890
    %v892 = vpop.f32.mrf.mxu0
    %v893 = vpop.f32.mrf.mxu0
    %v894 = vpop.f32.mrf.mxu0
    %895 = vdwg.mxu0
    %v912 = vunpack.c.l.b16 %v774
    %v913 = vunpack.c.l.b16 %v775
    %v914 = vunpack.c.l.b16 %v776
    %v915 = vunpack.c.l.b16 %v777
    %v916 = vunpack.c.l.b16 %v778
    %v917 = vunpack.c.l.b16 %v779
    %v918 = vunpack.c.l.b16 %v780
    %v919 = vunpack.c.l.b16 %v781
    %v920 = vunpack.c.l.b16 %v782
    %v921 = vunpack.c.l.b16 %v783
    %v922 = vunpack.c.l.b16 %v784
    %v923 = vunpack.c.l.b16 %v785
    %v924 = vunpack.c.l.b16 %v786
    %v925 = vunpack.c.l.b16 %v787
    %v926 = vunpack.c.l.b16 %v788
    %v927 = vunpack.c.l.b16 %v789
    %v928 = vpack.c.b16 %v913, %v912
    %v929 = vpack.c.b16 %v915, %v914
    %v930 = vpack.c.b16 %v917, %v916
    %v931 = vpack.c.b16 %v919, %v918
    %v932 = vpack.c.b16 %v921, %v920
    %v933 = vpack.c.b16 %v923, %v922
    %v934 = vpack.c.b16 %v925, %v924
    %v935 = vpack.c.b16 %v927, %v926
    %944 = vmatprep.subr.bf16.mxu0 0
    %945 = vmatpush1.bf16.msra.mxu0 %v935
    %946 = vmatprep.subr.bf16.mxu0 0
    %947 = vmatpush1.bf16.msra.mxu0 %v934
    %948 = vmatprep.subr.bf16.mxu0 0
    %949 = vmatpush1.bf16.msra.mxu0 %v933
    %950 = vmatprep.subr.bf16.mxu0 0
    %951 = vmatpush1.bf16.msra.mxu0 %v932
    %952 = vmatprep.subr.bf16.mxu0 0
    %953 = vmatpush1.bf16.msra.mxu0 %v931
    %954 = vmatprep.subr.bf16.mxu0 0
    %955 = vmatpush1.bf16.msra.mxu0 %v930
    %956 = vmatprep.subr.bf16.mxu0 0
    %957 = vmatpush1.bf16.msra.mxu0 %v929
    %958 = vmatprep.subr.bf16.mxu0 0
    %959 = vmatpush1.bf16.msra.mxu0 %v928
    %960 = vmatprep.subr.bf16.mxu0 0
    %961 = vmatpush2.bf16.msra.mxu0 0
    %962 = vmatprep.subr.bf16.mxu0 0
    %963 = vmatpush2.bf16.msra.mxu0 0
    %964 = vmatprep.subr.bf16.mxu0 0
    %965 = vmatpush2.bf16.msra.mxu0 0
    %966 = vmatprep.subr.bf16.mxu0 0
    %967 = vmatpush2.bf16.msra.mxu0 0
    %968 = vmatprep.subr.bf16.mxu0 0
    %969 = vmatpush2.bf16.msra.mxu0 0
    %970 = vmatprep.subr.bf16.mxu0 0
    %971 = vmatpush2.bf16.msra.mxu0 0
    %972 = vmatprep.subr.bf16.mxu0 0
    %973 = vmatpush2.bf16.msra.mxu0 0
    %974 = vmatprep.subr.bf16.mxu0 0
    %975 = vmatpush2.bf16.msra.mxu0 0
    %976 = vmatprep.mubr.bf16.mxu0 0
    %977 = vmatmul.mubr.bf16.gmra.mxu0 %v790
    %v978 = vpop.f32.mrf.mxu0
    %v979 = vadd.f32 %v891, %v978
    %v980 = vpop.f32.mrf.mxu0
    %v981 = vpop.f32.mrf.mxu0
    %v982 = vpop.f32.mrf.mxu0
    %983 = vdwg.mxu0
    %v984 = vlaneseq
    %v985 = vshrl.u32 %v984, 7
    %v986 = vsub.s32 0, %v985
    %v987 = vrot.slane %v192, %v986
    %v988 = vadd.f32 %v979, %v987
    %s989 = sshll.u32 %s201, 4
    %990 = dma.done %s113, %s989
    %v991 = vld [vmem:[#allocation3] sm:$0xf]
    %v992 = vld [vmem:[#allocation3 + $0x4] sm:$0xf]
    %v993 = vld [vmem:[#allocation3 + $0x8] sm:$0xf]
    %v994 = vld [vmem:[#allocation3 + $0xc] sm:$0xf]
    %v995 = vld [vmem:[#allocation3 + $0x10] sm:$0xf]
    %v996 = vld [vmem:[#allocation3 + $0x14] sm:$0xf]
    %v997 = vld [vmem:[#allocation3 + $0x18] sm:$0xf]
    %v998 = vld [vmem:[#allocation3 + $0x1c] sm:$0xf]
    %v999 = vld [vmem:[#allocation3 + $0x20] sm:$0xf]
    %v1000 = vld [vmem:[#allocation3 + $0x24] sm:$0xf]
    %v1001 = vld [vmem:[#allocation3 + $0x28] sm:$0xf]
    %v1002 = vld [vmem:[#allocation3 + $0x2c] sm:$0xf]
    %v1003 = vld [vmem:[#allocation3 + $0x30] sm:$0xf]
    %v1004 = vld [vmem:[#allocation3 + $0x34] sm:$0xf]
    %v1005 = vld [vmem:[#allocation3 + $0x38] sm:$0xf]
    %v1006 = vld [vmem:[#allocation3 + $0x3c] sm:$0xf]
    %v1007 = vpack.c.bf16 %v988, %v988
    %v1024 = vunpack.c.l.b16 %v991
    %v1025 = vunpack.c.l.b16 %v992
    %v1026 = vunpack.c.l.b16 %v993
    %v1027 = vunpack.c.l.b16 %v994
    %v1028 = vunpack.c.l.b16 %v995
    %v1029 = vunpack.c.l.b16 %v996
    %v1030 = vunpack.c.l.b16 %v997
    %v1031 = vunpack.c.l.b16 %v998
    %v1032 = vunpack.c.l.b16 %v999
    %v1033 = vunpack.c.l.b16 %v1000
    %v1034 = vunpack.c.l.b16 %v1001
    %v1035 = vunpack.c.l.b16 %v1002
    %v1036 = vunpack.c.l.b16 %v1003
    %v1037 = vunpack.c.l.b16 %v1004
    %v1038 = vunpack.c.l.b16 %v1005
    %v1039 = vunpack.c.l.b16 %v1006
    %v1040 = vpack.c.b16 %v1025, %v1024
    %v1041 = vpack.c.b16 %v1027, %v1026
    %v1042 = vpack.c.b16 %v1029, %v1028
    %v1043 = vpack.c.b16 %v1031, %v1030
    %v1044 = vpack.c.b16 %v1033, %v1032
    %v1045 = vpack.c.b16 %v1035, %v1034
    %v1046 = vpack.c.b16 %v1037, %v1036
    %v1047 = vpack.c.b16 %v1039, %v1038
    %1056 = vmatprep.subr.bf16.mxu0 0
    %1057 = vmatpush1.bf16.msra.mxu0 %v1047
    %1058 = vmatprep.subr.bf16.mxu0 0
    %1059 = vmatpush1.bf16.msra.mxu0 %v1046
    %1060 = vmatprep.subr.bf16.mxu0 0
    %1061 = vmatpush1.bf16.msra.mxu0 %v1045
    %1062 = vmatprep.subr.bf16.mxu0 0
    %1063 = vmatpush1.bf16.msra.mxu0 %v1044
    %1064 = vmatprep.subr.bf16.mxu0 0
    %1065 = vmatpush1.bf16.msra.mxu0 %v1043
    %1066 = vmatprep.subr.bf16.mxu0 0
    %1067 = vmatpush1.bf16.msra.mxu0 %v1042
    %1068 = vmatprep.subr.bf16.mxu0 0
    %1069 = vmatpush1.bf16.msra.mxu0 %v1041
    %1070 = vmatprep.subr.bf16.mxu0 0
    %1071 = vmatpush1.bf16.msra.mxu0 %v1040
    %1072 = vmatprep.subr.bf16.mxu0 0
    %1073 = vmatpush2.bf16.msra.mxu0 0
    %1074 = vmatprep.subr.bf16.mxu0 0
    %1075 = vmatpush2.bf16.msra.mxu0 0
    %1076 = vmatprep.subr.bf16.mxu0 0
    %1077 = vmatpush2.bf16.msra.mxu0 0
    %1078 = vmatprep.subr.bf16.mxu0 0
    %1079 = vmatpush2.bf16.msra.mxu0 0
    %1080 = vmatprep.subr.bf16.mxu0 0
    %1081 = vmatpush2.bf16.msra.mxu0 0
    %1082 = vmatprep.subr.bf16.mxu0 0
    %1083 = vmatpush2.bf16.msra.mxu0 0
    %1084 = vmatprep.subr.bf16.mxu0 0
    %1085 = vmatpush2.bf16.msra.mxu0 0
    %1086 = vmatprep.subr.bf16.mxu0 0
    %1087 = vmatpush2.bf16.msra.mxu0 0
    %1088 = vmatprep.mubr.bf16.mxu0 0
    %1089 = vmatmul.mubr.bf16.gmra.mxu0 %v1007
    %v1090 = vpop.f32.mrf.mxu0
    %v1091 = vadd.f32 0.0, %v1090
    %v1092 = vpop.f32.mrf.mxu0
    %v1093 = vpop.f32.mrf.mxu0
    %v1094 = vpop.f32.mrf.mxu0
    %1095 = vdwg.mxu0
    %v1096 = vrot.slane %v1091, 4
    %v1097 = vadd.f32 %v1091, %v1096
    %v1098 = vrot.slane %v1097, 2
    %v1099 = vadd.f32 %v1097, %v1098
    %v1100 = vrot.slane %v1099, 1
    %v1101 = vadd.f32 %v1099, %v1100
    %v1102 = vmul.f32 %v1101, 0.125
    %v1103 = vsub.f32 %v1091, %v1102
    %v1104 = vmul.f32 %v1103, %v1103
    %v1105 = vrot.slane %v1104, 4
    %v1106 = vadd.f32 %v1104, %v1105
    %v1107 = vrot.slane %v1106, 2
    %v1108 = vadd.f32 %v1106, %v1107
    %v1109 = vrot.slane %v1108, 1
    %v1110 = vadd.f32 %v1108, %v1109
    %v1111 = vmul.f32 %v1110, 0.125
    %v1112 = vadd.f32 %v1111, 1e-05
    %v1113 = vrsqrt.pop %v1112
    %v1114 = vmul.f32 %v193, %v1113
    %v1115 = vlaneseq
    %v1116 = vshrl.u32 %v1115, 7
    %v1117 = vsub.s32 0, %v1116
    %v1118 = vrot.slane %v1114, %v1117
    %v1119 = vmul.f32 %v1103, %v1118
    %v1120 = vlaneseq
    %v1121 = vshrl.u32 %v1120, 7
    %v1122 = vsub.s32 0, %v1121
    %v1123 = vrot.slane %v194, %v1122
    %v1124 = vadd.f32 %v1119, %v1123
    %v1125 = vmax.f32 %v1124, 0.0
    %s1126 = sshll.u32 %s201, 4
    %1127 = dma.done %s127, %s1126
    %v1128 = vld [vmem:[%s126] sm:$0xf]
    %v1129 = vld [vmem:[%s126 + $0x4] sm:$0xf]
    %v1130 = vld [vmem:[%s126 + $0x8] sm:$0xf]
    %v1131 = vld [vmem:[%s126 + $0xc] sm:$0xf]
    %v1132 = vld [vmem:[%s126 + $0x10] sm:$0xf]
    %v1133 = vld [vmem:[%s126 + $0x14] sm:$0xf]
    %v1134 = vld [vmem:[%s126 + $0x18] sm:$0xf]
    %v1135 = vld [vmem:[%s126 + $0x1c] sm:$0xf]
    %v1136 = vld [vmem:[%s126 + $0x20] sm:$0xf]
    %v1137 = vld [vmem:[%s126 + $0x24] sm:$0xf]
    %v1138 = vld [vmem:[%s126 + $0x28] sm:$0xf]
    %v1139 = vld [vmem:[%s126 + $0x2c] sm:$0xf]
    %v1140 = vld [vmem:[%s126 + $0x30] sm:$0xf]
    %v1141 = vld [vmem:[%s126 + $0x34] sm:$0xf]
    %v1142 = vld [vmem:[%s126 + $0x38] sm:$0xf]
    %v1143 = vld [vmem:[%s126 + $0x3c] sm:$0xf]
    %v1144 = vpack.c.bf16 %v1125, %v1125
    %v1161 = vunpack.c.l.b16 %v1128
    %v1162 = vunpack.c.l.b16 %v1129
    %v1163 = vunpack.c.l.b16 %v1130
    %v1164 = vunpack.c.l.b16 %v1131
    %v1165 = vunpack.c.l.b16 %v1132
    %v1166 = vunpack.c.l.b16 %v1133
    %v1167 = vunpack.c.l.b16 %v1134
    %v1168 = vunpack.c.l.b16 %v1135
    %v1169 = vunpack.c.l.b16 %v1136
    %v1170 = vunpack.c.l.b16 %v1137
    %v1171 = vunpack.c.l.b16 %v1138
    %v1172 = vunpack.c.l.b16 %v1139
    %v1173 = vunpack.c.l.b16 %v1140
    %v1174 = vunpack.c.l.b16 %v1141
    %v1175 = vunpack.c.l.b16 %v1142
    %v1176 = vunpack.c.l.b16 %v1143
    %v1177 = vpack.c.b16 %v1162, %v1161
    %v1178 = vpack.c.b16 %v1164, %v1163
    %v1179 = vpack.c.b16 %v1166, %v1165
    %v1180 = vpack.c.b16 %v1168, %v1167
    %v1181 = vpack.c.b16 %v1170, %v1169
    %v1182 = vpack.c.b16 %v1172, %v1171
    %v1183 = vpack.c.b16 %v1174, %v1173
    %v1184 = vpack.c.b16 %v1176, %v1175
    %1193 = vmatprep.subr.bf16.mxu0 0
    %1194 = vmatpush1.bf16.msra.mxu0 %v1184
    %1195 = vmatprep.subr.bf16.mxu0 0
    %1196 = vmatpush1.bf16.msra.mxu0 %v1183
    %1197 = vmatprep.subr.bf16.mxu0 0
    %1198 = vmatpush1.bf16.msra.mxu0 %v1182
    %1199 = vmatprep.subr.bf16.mxu0 0
    %1200 = vmatpush1.bf16.msra.mxu0 %v1181
    %1201 = vmatprep.subr.bf16.mxu0 0
    %1202 = vmatpush1.bf16.msra.mxu0 %v1180
    %1203 = vmatprep.subr.bf16.mxu0 0
    %1204 = vmatpush1.bf16.msra.mxu0 %v1179
    %1205 = vmatprep.subr.bf16.mxu0 0
    %1206 = vmatpush1.bf16.msra.mxu0 %v1178
    %1207 = vmatprep.subr.bf16.mxu0 0
    %1208 = vmatpush1.bf16.msra.mxu0 %v1177
    %1209 = vmatprep.subr.bf16.mxu0 0
    %1210 = vmatpush2.bf16.msra.mxu0 0
    %1211 = vmatprep.subr.bf16.mxu0 0
    %1212 = vmatpush2.bf16.msra.mxu0 0
    %1213 = vmatprep.subr.bf16.mxu0 0
    %1214 = vmatpush2.bf16.msra.mxu0 0
    %1215 = vmatprep.subr.bf16.mxu0 0
    %1216 = vmatpush2.bf16.msra.mxu0 0
    %1217 = vmatprep.subr.bf16.mxu0 0
    %1218 = vmatpush2.bf16.msra.mxu0 0
    %1219 = vmatprep.subr.bf16.mxu0 0
    %1220 = vmatpush2.bf16.msra.mxu0 0
    %1221 = vmatprep.subr.bf16.mxu0 0
    %1222 = vmatpush2.bf16.msra.mxu0 0
    %1223 = vmatprep.subr.bf16.mxu0 0
    %1224 = vmatpush2.bf16.msra.mxu0 0
    %1225 = vmatprep.mubr.bf16.mxu0 0
    %1226 = vmatmul.mubr.bf16.gmra.mxu0 %v1144
    %v1227 = vpop.f32.mrf.mxu0
    %v1228 = vadd.f32 0.0, %v1227
    %v1229 = vpop.f32.mrf.mxu0
    %v1230 = vpop.f32.mrf.mxu0
    %v1231 = vpop.f32.mrf.mxu0
    %1232 = vdwg.mxu0
    %v1233 = vrot.slane %v1228, 4
    %v1234 = vadd.f32 %v1228, %v1233
    %v1235 = vrot.slane %v1234, 2
    %v1236 = vadd.f32 %v1234, %v1235
    %v1237 = vrot.slane %v1236, 1
    %v1238 = vadd.f32 %v1236, %v1237
    %v1239 = vmul.f32 %v1238, 0.125
    %v1240 = vsub.f32 %v1228, %v1239
    %v1241 = vmul.f32 %v1240, %v1240
    %v1242 = vrot.slane %v1241, 4
    %v1243 = vadd.f32 %v1241, %v1242
    %v1244 = vrot.slane %v1243, 2
    %v1245 = vadd.f32 %v1243, %v1244
    %v1246 = vrot.slane %v1245, 1
    %v1247 = vadd.f32 %v1245, %v1246
    %v1248 = vmul.f32 %v1247, 0.125
    %v1249 = vadd.f32 %v1248, 1e-05
    %v1250 = vrsqrt.pop %v1249
    %v1251 = vmul.f32 %v195, %v1250
    %v1252 = vlaneseq
    %v1253 = vshrl.u32 %v1252, 7
    %v1254 = vsub.s32 0, %v1253
    %v1255 = vrot.slane %v1251, %v1254
    %v1256 = vmul.f32 %v1240, %v1255
    %v1257 = vlaneseq
    %v1258 = vshrl.u32 %v1257, 7
    %v1259 = vsub.s32 0, %v1258
    %v1260 = vrot.slane %v196, %v1259
    %v1261 = vadd.f32 %v1256, %v1260
    %v1262 = vadd.f32 %v1261, %v988
    %v1263 = vmax.f32 %v1262, 0.0
    %s1264 = sshll.u32 %s201, 4
    %1265 = dma.done %s175, %s1264
    %v1266 = vld [vmem:[#allocation7] sm:$0xf]
    %v1267 = vld [vmem:[#allocation7 + $0x4] sm:$0xf]
    %v1268 = vld [vmem:[#allocation7 + $0x8] sm:$0xf]
    %v1269 = vld [vmem:[#allocation7 + $0xc] sm:$0xf]
    %v1270 = vld [vmem:[#allocation7 + $0x10] sm:$0xf]
    %v1271 = vld [vmem:[#allocation7 + $0x14] sm:$0xf]
    %v1272 = vld [vmem:[#allocation7 + $0x18] sm:$0xf]
    %v1273 = vld [vmem:[#allocation7 + $0x1c] sm:$0xf]
    %v1274 = vld [vmem:[#allocation7 + $0x20] sm:$0xf]
    %v1275 = vld [vmem:[#allocation7 + $0x24] sm:$0xf]
    %v1276 = vld [vmem:[#allocation7 + $0x28] sm:$0xf]
    %v1277 = vld [vmem:[#allocation7 + $0x2c] sm:$0xf]
    %v1278 = vld [vmem:[#allocation7 + $0x30] sm:$0xf]
    %v1279 = vld [vmem:[#allocation7 + $0x34] sm:$0xf]
    %v1280 = vld [vmem:[#allocation7 + $0x38] sm:$0xf]
    %v1281 = vld [vmem:[#allocation7 + $0x3c] sm:$0xf]
    %v1282 = vpack.c.bf16 %v1263, %v1263
    %v1283 = vld [vmem:[%s5] sm:$0x1]
    %v1285 = vlaneseq
    %v1286 = vshrl.u32 %v1285, 7
    %v1287 = vsub.s32 0, %v1286
    %v1288 = vrot.slane %v1283, %v1287
    %v1306 = vunpack.c.l.b16 %v1266
    %v1307 = vunpack.c.l.b16 %v1267
    %v1308 = vunpack.c.l.b16 %v1268
    %v1309 = vunpack.c.l.b16 %v1269
    %v1310 = vunpack.c.l.b16 %v1270
    %v1311 = vunpack.c.l.b16 %v1271
    %v1312 = vunpack.c.l.b16 %v1272
    %v1313 = vunpack.c.l.b16 %v1273
    %v1314 = vunpack.c.l.b16 %v1274
    %v1315 = vunpack.c.l.b16 %v1275
    %v1316 = vunpack.c.l.b16 %v1276
    %v1317 = vunpack.c.l.b16 %v1277
    %v1318 = vunpack.c.l.b16 %v1278
    %v1319 = vunpack.c.l.b16 %v1279
    %v1320 = vunpack.c.l.b16 %v1280
    %v1321 = vunpack.c.l.b16 %v1281
    %v1322 = vpack.c.b16 %v1307, %v1306
    %v1323 = vpack.c.b16 %v1309, %v1308
    %v1324 = vpack.c.b16 %v1311, %v1310
    %v1325 = vpack.c.b16 %v1313, %v1312
    %v1326 = vpack.c.b16 %v1315, %v1314
    %v1327 = vpack.c.b16 %v1317, %v1316
    %v1328 = vpack.c.b16 %v1319, %v1318
    %v1329 = vpack.c.b16 %v1321, %v1320
    %1338 = vmatprep.subr.bf16.mxu0 0
    %1339 = vmatpush1.bf16.msra.mxu0 %v1329
    %1340 = vmatprep.subr.bf16.mxu0 0
    %1341 = vmatpush1.bf16.msra.mxu0 %v1328
    %1342 = vmatprep.subr.bf16.mxu0 0
    %1343 = vmatpush1.bf16.msra.mxu0 %v1327
    %1344 = vmatprep.subr.bf16.mxu0 0
    %1345 = vmatpush1.bf16.msra.mxu0 %v1326
    %1346 = vmatprep.subr.bf16.mxu0 0
    %1347 = vmatpush1.bf16.msra.mxu0 %v1325
    %1348 = vmatprep.subr.bf16.mxu0 0
    %1349 = vmatpush1.bf16.msra.mxu0 %v1324
    %1350 = vmatprep.subr.bf16.mxu0 0
    %1351 = vmatpush1.bf16.msra.mxu0 %v1323
    %1352 = vmatprep.subr.bf16.mxu0 0
    %1353 = vmatpush1.bf16.msra.mxu0 %v1322
    %1354 = vmatprep.subr.bf16.mxu0 0
    %1355 = vmatpush2.bf16.msra.mxu0 0
    %1356 = vmatprep.subr.bf16.mxu0 0
    %1357 = vmatpush2.bf16.msra.mxu0 0
    %1358 = vmatprep.subr.bf16.mxu0 0
    %1359 = vmatpush2.bf16.msra.mxu0 0
    %1360 = vmatprep.subr.bf16.mxu0 0
    %1361 = vmatpush2.bf16.msra.mxu0 0
    %1362 = vmatprep.subr.bf16.mxu0 0
    %1363 = vmatpush2.bf16.msra.mxu0 0
    %1364 = vmatprep.subr.bf16.mxu0 0
    %1365 = vmatpush2.bf16.msra.mxu0 0
    %1366 = vmatprep.subr.bf16.mxu0 0
    %1367 = vmatpush2.bf16.msra.mxu0 0
    %1368 = vmatprep.subr.bf16.mxu0 0
    %1369 = vmatpush2.bf16.msra.mxu0 0
    %1370 = vmatprep.mubr.bf16.mxu0 0
    %1371 = vmatmul.mubr.bf16.gmra.mxu0 %v1282
    %v1372 = vpop.f32.mrf.mxu0
    %v1373 = vadd.f32 %v1288, %v1372
    %v1374 = vpop.f32.mrf.mxu0
    %v1375 = vpop.f32.mrf.mxu0
    %v1376 = vpop.f32.mrf.mxu0
    %1377 = vdwg.mxu0
    %1378 = vst [vmem:[%s12] sm:$0xff] %v1373
    %1379 = vst [vmem:[%s12 + $0x8] sm:$0xff] %v759
    %1380 = vst [vmem:[%s12 + $0x10] sm:$0xff] %v761
    // Predicated region
    $region100: #{conditional_ghdvae_forward.1} parent=1 // pred_check
      _
    $region101: #{conditional_ghdvae_forward.1} parent=1 // pred_check_branch
      %1382 = sbr.rel (0) target = $region103
    $region102: #{conditional_ghdvae_forward.1} parent=1 // pred_region
      _
    $region103: #{conditional_ghdvae_forward.1} parent=1 // pred_fallthru
      _
    // Predicated region
    $region104: #{conditional_ghdvae_forward.1} parent=1 // pred_check
      _
    $region105: #{conditional_ghdvae_forward.1} parent=1 // pred_check_branch
      %1384 = sbr.rel (0) target = $region107
    $region106: #{conditional_ghdvae_forward.1} parent=1 // pred_region
      _
    $region107: #{conditional_ghdvae_forward.1} parent=1 // pred_fallthru
      _
    %1385 = vsyncpa [#allocation10], 1
    %1386 = vsyncpa [#allocation12], 1
  %1387 = vsyncmov [#allocation8]
  %s1388 = vpop.sfrf %1387
  %p1389 = scmp.eq.s32.totalorder %s1388, 0
  %p1390 = pneg %p1389
  %1392 = shalt.err (%p1390)
  %s1393 = scalar_lea.sflag [#allocation8], 1
  %1394 = vsyncmov %s1393
  %s1395 = vpop.sfrf %1394
  %p1396 = scmp.eq.s32.totalorder %s1395, 0
  %p1397 = pneg %p1396
  %1399 = shalt.err (%p1397)
  %s1400 = scalar_lea.sflag [#allocation8], 2
  %1401 = vsyncmov %s1400
  %s1402 = vpop.sfrf %1401
  %p1403 = scmp.eq.s32.totalorder %s1402, 0
  %p1404 = pneg %p1403
  %1406 = shalt.err (%p1404)
  %s1407 = scalar_lea.sflag [#allocation8], 3
  %1408 = vsyncmov %s1407
  %s1409 = vpop.sfrf %1408
  %p1410 = scmp.eq.s32.totalorder %s1409, 0
  %p1411 = pneg %p1410
  %1413 = shalt.err (%p1411)
  %s1414 = scalar_lea.sflag [#allocation8], 4
  %1415 = vsyncmov %s1414
  %s1416 = vpop.sfrf %1415
  %p1417 = scmp.eq.s32.totalorder %s1416, 0
  %p1418 = pneg %p1417
  %1420 = shalt.err (%p1418)
  %s1421 = scalar_lea.sflag [#allocation8], 5
  %1422 = vsyncmov %s1421
  %s1423 = vpop.sfrf %1422
  %p1424 = scmp.eq.s32.totalorder %s1423, 0
  %p1425 = pneg %p1424
  %1427 = shalt.err (%p1425)
  %s1428 = scalar_lea.sflag [#allocation8], 6
  %1429 = vsyncmov %s1428
  %s1430 = vpop.sfrf %1429
  %p1431 = scmp.eq.s32.totalorder %s1430, 0
  %p1432 = pneg %p1431
  %1434 = shalt.err (%p1432)

</llo_original>
